<compile_context>
chip_gen: v7x
topology: tpu7x:2x2x1
jax: 0.10.0
libtpu: 0.0.40
codegen_flags: <defaults>
</compile_context>

<pallas_src>
import jax
import jax.numpy as jnp
from jax.experimental import pallas as pl
from jax.experimental.pallas import tpu as pltpu


# ---------------------------------------------------------------------------
# Kernels
# ---------------------------------------------------------------------------

def _encode_project_kernel(x_ref, we1_ref, be1_ref, we2_ref, be2_ref,
                           wih_ref, brnn_ref, xproj_ref):
    """xproj = sigmoid(sigmoid(x@We1+be1)@We2+be2) @ Wih + (bih+bhh), one T-chunk."""
    Tc, Bp, in_p = x_ref.shape
    h_p = xproj_ref.shape[-1]
    x2 = x_ref[...].reshape(Tc * Bp, in_p)          # (Tc*Bp, in_p) lane-dense slab
    e1 = jax.nn.sigmoid(
        jnp.dot(x2, we1_ref[...], preferred_element_type=jnp.float32)
        + be1_ref[...])
    e2 = jax.nn.sigmoid(
        jnp.dot(e1, we2_ref[...], preferred_element_type=jnp.float32)
        + be2_ref[...])
    xp = (jnp.dot(e2, wih_ref[...], preferred_element_type=jnp.float32)
          + brnn_ref[...])
    xproj_ref[...] = xp.reshape(Tc, Bp, h_p).astype(xproj_ref.dtype)


def _rnn_decode_kernel(xproj_ref, whh_ref, wd1_ref, bd1_ref, wd2_ref, bd2_ref,
                       latent_ref, out_ref, h_scr):
    """Serial recurrence (h carried across grid steps) + fused decoder for the chunk."""
    Tc, Bp, h_p = xproj_ref.shape
    out_p = out_ref.shape[-1]

    @pl.when(pl.program_id(0) == 0)
    def _():
        h_scr[...] = jnp.zeros_like(h_scr)

    def body(t, h):
        h_new = jnp.tanh(
            xproj_ref[t]
            + jnp.dot(h, whh_ref[...], preferred_element_type=jnp.float32))
        latent_ref[t] = h_new.astype(latent_ref.dtype)
        return h_new

    # Bounded unroll: full unroll only for small per-chunk trip counts.
    unroll = True if Tc <= 8 else 8
    h_final = jax.lax.fori_loop(0, Tc, body, h_scr[...], unroll=unroll)
    h_scr[...] = h_final                            # carry to next chunk

    # Fused decoder on the chunk's latents (still resident in VMEM).
    lat2 = latent_ref[...].reshape(Tc * Bp, h_p)
    d1 = jax.nn.sigmoid(
        jnp.dot(lat2, wd1_ref[...], preferred_element_type=jnp.float32)
        + bd1_ref[...])
    out2 = (jnp.dot(d1, wd2_ref[...], preferred_element_type=jnp.float32)
            + bd2_ref[...])
    out_ref[...] = out2.reshape(Tc, Bp, out_p).astype(out_ref.dtype)


# ---------------------------------------------------------------------------
# Wrapper
# ---------------------------------------------------------------------------

_LANE = 128
_SUBLANE = 8


def _round_up(n, m):
    return ((n + m - 1) // m) * m


def _pad2d(a, rows, cols):
    return jnp.pad(a, ((0, rows - a.shape[0]), (0, cols - a.shape[1])))


def _w_spec(arr):
    ndim = arr.ndim
    return pl.BlockSpec(arr.shape, lambda i, _n=ndim: (0,) * _n)


@jax.jit
def autoencoder_rnn_forward(x, params):
    """x: [T, B, input_size] float32. params: dict of (in, out)-layout weights."""
    T, B, in_sz = x.shape
    hidden = params["whh"].shape[0]
    mid1 = params["we1"].shape[1]
    mid2 = params["wd1"].shape[1]
    out_sz = params["wd2"].shape[1]

    # Lane-padded (MXU-aligned) feature dims; sublane-padded batch.
    in_p = _round_up(in_sz, _LANE)
    m1_p = _round_up(mid1, _LANE)
    h_p = _round_up(hidden, _LANE)
    m2_p = _round_up(mid2, _LANE)
    op = _round_up(out_sz, _LANE)
    Bp = _round_up(B, _SUBLANE)

    # T-chunking: Tc*Bp rows per encoder/decoder matmul slab (target ~512 rows),
    # and the recurrence stages only O(Tc*Bp*h_p) per chunk in VMEM.
    Tc = min(64, T)
    Tp = _round_up(T, Tc)
    n_chunks = Tp // Tc

    # Zero-padded parameters: padded channels stay exactly ineffective because the
    # corresponding downstream weight ROWS are zero (sigmoid(0)=0.5 in padded
    # encoder channels is multiplied by zero rows of the next weight matrix).
    we1 = _pad2d(params["we1"], in_p, m1_p)
    be1 = _pad2d(params["be1"], 1, m1_p)
    we2 = _pad2d(params["we2"], m1_p, h_p)
    be2 = _pad2d(params["be2"], 1, h_p)
    wih = _pad2d(params["wih"], h_p, h_p)
    whh = _pad2d(params["whh"], h_p, h_p)
    brnn = _pad2d(params["bih"] + params["bhh"], 1, h_p)   # folded RNN biases
    wd1 = _pad2d(params["wd1"], h_p, m2_p)
    bd1 = _pad2d(params["bd1"], 1, m2_p)
    wd2 = _pad2d(params["wd2"], m2_p, op)
    bd2 = _pad2d(params["bd2"], 1, op)

    # Single padded 3-D layout used by both kernels (no reshape glue in between).
    x_p = jnp.pad(x, ((0, Tp - T), (0, Bp - B), (0, in_p - in_sz)))

    # ---- 1) hoisted encoder + input projection (parallel over T-chunks) ----
    xproj = pl.pallas_call(
        _encode_project_kernel,
        out_shape=jax.ShapeDtypeStruct((Tp, Bp, h_p), jnp.float32),
        grid_spec=pltpu.PrefetchScalarGridSpec(
            num_scalar_prefetch=0,
            grid=(n_chunks,),
            in_specs=[
                pl.BlockSpec((Tc, Bp, in_p), lambda i: (i, 0, 0)),
                _w_spec(we1), _w_spec(be1), _w_spec(we2), _w_spec(be2),
                _w_spec(wih), _w_spec(brnn),
            ],
            out_specs=pl.BlockSpec((Tc, Bp, h_p), lambda i: (i, 0, 0)),
        ),
        compiler_params=pltpu.CompilerParams(
            dimension_semantics=("parallel",)),
    )(x_p, we1, be1, we2, be2, wih, brnn)

    # ---- 2) serial recurrence + fused decoder (arbitrary over T-chunks) ----
    latent_pad, out_pad = pl.pallas_call(
        _rnn_decode_kernel,
        out_shape=(jax.ShapeDtypeStruct((Tp, Bp, h_p), jnp.float32),
                   jax.ShapeDtypeStruct((Tp, Bp, op), jnp.float32)),
        grid_spec=pltpu.PrefetchScalarGridSpec(
            num_scalar_prefetch=0,
            grid=(n_chunks,),
            in_specs=[
                pl.BlockSpec((Tc, Bp, h_p), lambda i: (i, 0, 0)),
                _w_spec(whh), _w_spec(wd1), _w_spec(bd1),
                _w_spec(wd2), _w_spec(bd2),
            ],
            out_specs=(pl.BlockSpec((Tc, Bp, h_p), lambda i: (i, 0, 0)),
                       pl.BlockSpec((Tc, Bp, op), lambda i: (i, 0, 0))),
            scratch_shapes=[pltpu.VMEM((Bp, h_p), jnp.float32)],  # carried h state
        ),
        compiler_params=pltpu.CompilerParams(
            dimension_semantics=("arbitrary",)),
    )(xproj, whh, wd1, bd1, wd2, bd2)

    out = out_pad[:T, :B, :out_sz]
    latent = latent_pad[:T, :B, :hidden]
    return out, latent


# ---------------------------------------------------------------------------
# Parameters + pure-JAX reference
# ---------------------------------------------------------------------------

def make_params(key, input_size, hidden_size, output_size):
    """Deterministic synthetic parameters. Weights stored as (in, out)."""
    mid1 = (input_size + hidden_size) // 2
    mid2 = (hidden_size + output_size) // 2
    shapes = {
        "we1": (input_size, mid1),   "be1": (1, mid1),
        "we2": (mid1, hidden_size),  "be2": (1, hidden_size),
        "wih": (hidden_size, hidden_size), "bih": (1, hidden_size),
        "whh": (hidden_size, hidden_size), "bhh": (1, hidden_size),
        "wd1": (hidden_size, mid2),  "bd1": (1, mid2),
        "wd2": (mid2, output_size),  "bd2": (1, output_size),
    }
    params = {}
    keys = jax.random.split(key, len(shapes))
    for k, (name, shp) in zip(keys, sorted(shapes.items())):
        params[name] = (jax.random.normal(k, shp, jnp.float32) * 0.2)
    return params


def reference_forward(x, p):
    """Pure-JAX reference for correctness checking."""
    e1 = jax.nn.sigmoid(x @ p["we1"] + p["be1"])
    e2 = jax.nn.sigmoid(e1 @ p["we2"] + p["be2"])

    def step(h, xt):
        h_new = jnp.tanh(xt @ p["wih"] + p["bih"] + h @ p["whh"] + p["bhh"])
        return h_new, h_new

    h0 = jnp.zeros((x.shape[1], p["whh"].shape[0]), jnp.float32)
    _, latent = jax.lax.scan(step, h0, e2)
    d1 = jax.nn.sigmoid(latent @ p["wd1"] + p["bd1"])
    out = d1 @ p["wd2"] + p["bd2"]
    return out, latent


if __name__ == "__main__":
    T, B = 8, 4
    input_size, hidden_size, output_size = 16, 32, 16

    key = jax.random.PRNGKey(0)
    k_x, k_p = jax.random.split(key)
    x = jax.random.normal(k_x, (T, B, input_size), jnp.float32)
    params = make_params(k_p, input_size, hidden_size, output_size)

    out, latent = autoencoder_rnn_forward(x, params)
    jax.block_until_ready((out, latent))

    ref_out, ref_latent = reference_forward(x, params)
    assert out.shape == (T, B, output_size)
    assert latent.shape == (T, B, hidden_size)
    assert jnp.allclose(out, ref_out, atol=1e-4, rtol=1e-4)
    assert jnp.allclose(latent, ref_latent, atol=1e-4, rtol=1e-4)

    print("KERNEL_OK")
</pallas_src>

<mosaic_0001>
module attributes {stable_mosaic.version = 11 : i64} {
  func.func @_encode_project_kernel(%arg0: i32, %arg1: memref<8x8x128xf32, #tpu.memory_space<vmem>>, %arg2: memref<128x128xf32, #tpu.memory_space<vmem>>, %arg3: memref<1x128xf32, #tpu.memory_space<vmem>>, %arg4: memref<128x128xf32, #tpu.memory_space<vmem>>, %arg5: memref<1x128xf32, #tpu.memory_space<vmem>>, %arg6: memref<128x128xf32, #tpu.memory_space<vmem>>, %arg7: memref<1x128xf32, #tpu.memory_space<vmem>>, %arg8: memref<8x8x128xf32, #tpu.memory_space<vmem>>) attributes {dimension_semantics = [#tpu.dimension_semantics<parallel>], iteration_bounds = array<i64: 1>, scalar_prefetch = 0 : i64, scratch_operands = 0 : i64, tpu.core_type = #tpu.core_type<tc>, window_params = [{transform_indices = @transform_0, window_bounds = array<i64: 8, 8, 128>}, {pipeline_mode = #tpu.pipeline_mode<synchronous>, transform_indices = @transform_1, window_bounds = array<i64: 128, 128>}, {pipeline_mode = #tpu.pipeline_mode<synchronous>, transform_indices = @transform_2, window_bounds = array<i64: 1, 128>}, {pipeline_mode = #tpu.pipeline_mode<synchronous>, transform_indices = @transform_3, window_bounds = array<i64: 128, 128>}, {pipeline_mode = #tpu.pipeline_mode<synchronous>, transform_indices = @transform_4, window_bounds = array<i64: 1, 128>}, {pipeline_mode = #tpu.pipeline_mode<synchronous>, transform_indices = @transform_5, window_bounds = array<i64: 128, 128>}, {pipeline_mode = #tpu.pipeline_mode<synchronous>, transform_indices = @transform_6, window_bounds = array<i64: 1, 128>}, {transform_indices = @transform_7, window_bounds = array<i64: 8, 8, 128>}]} {
    %c0 = arith.constant 0 : index
    %c0_0 = arith.constant 0 : index
    %c0_1 = arith.constant 0 : index
    %0 = vector.load %arg1[%c0, %c0_0, %c0_1] : memref<8x8x128xf32, #tpu.memory_space<vmem>>, vector<8x8x128xf32>
    %1 = vector.shape_cast %0 : vector<8x8x128xf32> to vector<64x128xf32>
    %c0_2 = arith.constant 0 : index
    %c0_3 = arith.constant 0 : index
    %2 = vector.load %arg2[%c0_2, %c0_3] : memref<128x128xf32, #tpu.memory_space<vmem>>, vector<128x128xf32>
    %cst = arith.constant dense<0.000000e+00> : vector<64x128xf32>
    %3 = tpu.matmul %1, %2, %cst {dimension_numbers = #tpu.dot_dimension_numbers<[1], [0], [0], [1], [0, 0, 1, 1], [], []>} : vector<64x128xf32>, vector<128x128xf32>, vector<64x128xf32> -> vector<64x128xf32>
    %c0_4 = arith.constant 0 : index
    %c0_5 = arith.constant 0 : index
    %4 = vector.load %arg3[%c0_4, %c0_5] : memref<1x128xf32, #tpu.memory_space<vmem>>, vector<1x128xf32>
    %5 = vector.broadcast %4 : vector<1x128xf32> to vector<64x128xf32>
    %6 = arith.addf %3, %5 : vector<64x128xf32>
    %7 = arith.negf %6 : vector<64x128xf32>
    %8 = math.exp %7 : vector<64x128xf32>
    %cst_6 = arith.constant 1.000000e+00 : f32
    %9 = vector.broadcast %cst_6 : f32 to vector<64x128xf32>
    %10 = arith.addf %9, %8 : vector<64x128xf32>
    %11 = arith.divf %9, %10 : vector<64x128xf32>
    %c0_7 = arith.constant 0 : index
    %c0_8 = arith.constant 0 : index
    %12 = vector.load %arg4[%c0_7, %c0_8] : memref<128x128xf32, #tpu.memory_space<vmem>>, vector<128x128xf32>
    %cst_9 = arith.constant dense<0.000000e+00> : vector<64x128xf32>
    %13 = tpu.matmul %11, %12, %cst_9 {dimension_numbers = #tpu.dot_dimension_numbers<[1], [0], [0], [1], [0, 0, 1, 1], [], []>} : vector<64x128xf32>, vector<128x128xf32>, vector<64x128xf32> -> vector<64x128xf32>
    %c0_10 = arith.constant 0 : index
    %c0_11 = arith.constant 0 : index
    %14 = vector.load %arg5[%c0_10, %c0_11] : memref<1x128xf32, #tpu.memory_space<vmem>>, vector<1x128xf32>
    %15 = vector.broadcast %14 : vector<1x128xf32> to vector<64x128xf32>
    %16 = arith.addf %13, %15 : vector<64x128xf32>
    %17 = arith.negf %16 : vector<64x128xf32>
    %18 = math.exp %17 : vector<64x128xf32>
    %cst_12 = arith.constant 1.000000e+00 : f32
    %19 = vector.broadcast %cst_12 : f32 to vector<64x128xf32>
    %20 = arith.addf %19, %18 : vector<64x128xf32>
    %21 = arith.divf %19, %20 : vector<64x128xf32>
    %c0_13 = arith.constant 0 : index
    %c0_14 = arith.constant 0 : index
    %22 = vector.load %arg6[%c0_13, %c0_14] : memref<128x128xf32, #tpu.memory_space<vmem>>, vector<128x128xf32>
    %cst_15 = arith.constant dense<0.000000e+00> : vector<64x128xf32>
    %23 = tpu.matmul %21, %22, %cst_15 {dimension_numbers = #tpu.dot_dimension_numbers<[1], [0], [0], [1], [0, 0, 1, 1], [], []>} : vector<64x128xf32>, vector<128x128xf32>, vector<64x128xf32> -> vector<64x128xf32>
    %c0_16 = arith.constant 0 : index
    %c0_17 = arith.constant 0 : index
    %24 = vector.load %arg7[%c0_16, %c0_17] : memref<1x128xf32, #tpu.memory_space<vmem>>, vector<1x128xf32>
    %25 = vector.broadcast %24 : vector<1x128xf32> to vector<64x128xf32>
    %26 = arith.addf %23, %25 : vector<64x128xf32>
    %27 = vector.shape_cast %26 : vector<64x128xf32> to vector<8x8x128xf32>
    %c0_18 = arith.constant 0 : index
    %c0_19 = arith.constant 0 : index
    %c0_20 = arith.constant 0 : index
    %28 = vector.load %arg8[%c0_18, %c0_19, %c0_20] : memref<8x8x128xf32, #tpu.memory_space<vmem>>, vector<8x8x128xf32>
    tpu.vector_store %arg8[%c0_18, %c0_19, %c0_20], %27 {strides = array<i32>} : memref<8x8x128xf32, #tpu.memory_space<vmem>>, vector<8x8x128xf32>,
    return
  }
  func.func @transform_0(%arg0: i32) -> (i32, i32, i32) {
    %c0_i32 = arith.constant 0 : i32
    %c0_i32_0 = arith.constant 0 : i32
    %c0_i32_1 = arith.constant 0 : i32
    return %arg0, %c0_i32, %c0_i32_0 : i32, i32, i32
  }
  func.func @transform_1(%arg0: i32) -> (i32, i32) {
    %c0_i32 = arith.constant 0 : i32
    %c0_i32_0 = arith.constant 0 : i32
    %c0_i32_1 = arith.constant 0 : i32
    return %c0_i32, %c0_i32_0 : i32, i32
  }
  func.func @transform_2(%arg0: i32) -> (i32, i32) {
    %c0_i32 = arith.constant 0 : i32
    %c0_i32_0 = arith.constant 0 : i32
    %c0_i32_1 = arith.constant 0 : i32
    return %c0_i32, %c0_i32_0 : i32, i32
  }
  func.func @transform_3(%arg0: i32) -> (i32, i32) {
    %c0_i32 = arith.constant 0 : i32
    %c0_i32_0 = arith.constant 0 : i32
    %c0_i32_1 = arith.constant 0 : i32
    return %c0_i32, %c0_i32_0 : i32, i32
  }
  func.func @transform_4(%arg0: i32) -> (i32, i32) {
    %c0_i32 = arith.constant 0 : i32
    %c0_i32_0 = arith.constant 0 : i32
    %c0_i32_1 = arith.constant 0 : i32
    return %c0_i32, %c0_i32_0 : i32, i32
  }
  func.func @transform_5(%arg0: i32) -> (i32, i32) {
    %c0_i32 = arith.constant 0 : i32
    %c0_i32_0 = arith.constant 0 : i32
    %c0_i32_1 = arith.constant 0 : i32
    return %c0_i32, %c0_i32_0 : i32, i32
  }
  func.func @transform_6(%arg0: i32) -> (i32, i32) {
    %c0_i32 = arith.constant 0 : i32
    %c0_i32_0 = arith.constant 0 : i32
    %c0_i32_1 = arith.constant 0 : i32
    return %c0_i32, %c0_i32_0 : i32, i32
  }
  func.func @transform_7(%arg0: i32) -> (i32, i32, i32) {
    %c0_i32 = arith.constant 0 : i32
    %c0_i32_0 = arith.constant 0 : i32
    %c0_i32_1 = arith.constant 0 : i32
    return %arg0, %c0_i32, %c0_i32_0 : i32, i32, i32
  }
}

module attributes {stable_mosaic.version = 11 : i64} {
  func.func @_rnn_decode_kernel(%arg0: i32, %arg1: memref<8x8x128xf32, #tpu.memory_space<vmem>>, %arg2: memref<128x128xf32, #tpu.memory_space<vmem>>, %arg3: memref<128x128xf32, #tpu.memory_space<vmem>>, %arg4: memref<1x128xf32, #tpu.memory_space<vmem>>, %arg5: memref<128x128xf32, #tpu.memory_space<vmem>>, %arg6: memref<1x128xf32, #tpu.memory_space<vmem>>, %arg7: memref<8x8x128xf32, #tpu.memory_space<vmem>>, %arg8: memref<8x8x128xf32, #tpu.memory_space<vmem>>, %arg9: memref<8x128xf32, #tpu.memory_space<vmem>>) attributes {dimension_semantics = [#tpu.dimension_semantics<arbitrary>], iteration_bounds = array<i64: 1>, scalar_prefetch = 0 : i64, scratch_operands = 1 : i64, tpu.core_type = #tpu.core_type<tc>, window_params = [{transform_indices = @transform_0, window_bounds = array<i64: 8, 8, 128>}, {pipeline_mode = #tpu.pipeline_mode<synchronous>, transform_indices = @transform_1, window_bounds = array<i64: 128, 128>}, {pipeline_mode = #tpu.pipeline_mode<synchronous>, transform_indices = @transform_2, window_bounds = array<i64: 128, 128>}, {pipeline_mode = #tpu.pipeline_mode<synchronous>, transform_indices = @transform_3, window_bounds = array<i64: 1, 128>}, {pipeline_mode = #tpu.pipeline_mode<synchronous>, transform_indices = @transform_4, window_bounds = array<i64: 128, 128>}, {pipeline_mode = #tpu.pipeline_mode<synchronous>, transform_indices = @transform_5, window_bounds = array<i64: 1, 128>}, {transform_indices = @transform_6, window_bounds = array<i64: 8, 8, 128>}, {transform_indices = @transform_7, window_bounds = array<i64: 8, 8, 128>}]} {
    %c0_i32 = arith.constant 0 : i32
    %0 = arith.cmpi eq, %arg0, %c0_i32 : i32
    %1 = arith.extui %0 : i1 to i32
    %c0_i32_0 = arith.constant 0 : i32
    %2 = arith.cmpi ne, %1, %c0_i32_0 : i32
    scf.if %2 {
      %cst_77 = arith.constant 0.000000e+00 : f32
      %112 = vector.broadcast %cst_77 : f32 to vector<8x128xf32>
      %c0_78 = arith.constant 0 : index
      %c0_79 = arith.constant 0 : index
      %113 = vector.load %arg9[%c0_78, %c0_79] : memref<8x128xf32, #tpu.memory_space<vmem>>, vector<8x128xf32>
      tpu.vector_store %arg9[%c0_78, %c0_79], %112 {strides = array<i32>} : memref<8x128xf32, #tpu.memory_space<vmem>>, vector<8x128xf32>,
    } else {
    }
    %c0 = arith.constant 0 : index
    %c0_1 = arith.constant 0 : index
    %3 = vector.load %arg9[%c0, %c0_1] : memref<8x128xf32, #tpu.memory_space<vmem>>, vector<8x128xf32>
    %c0_i32_2 = arith.constant 0 : i32
    %4 = arith.index_cast %c0_i32_2 : i32 to index
    %c0_3 = arith.constant 0 : index
    %c0_4 = arith.constant 0 : index
    %5 = vector.load %arg1[%4, %c0_3, %c0_4] : memref<8x8x128xf32, #tpu.memory_space<vmem>>, vector<1x8x128xf32>
    %6 = vector.shape_cast %5 : vector<1x8x128xf32> to vector<8x128xf32>
    %c0_5 = arith.constant 0 : index
    %c0_6 = arith.constant 0 : index
    %7 = vector.load %arg2[%c0_5, %c0_6] : memref<128x128xf32, #tpu.memory_space<vmem>>, vector<128x128xf32>
    %cst = arith.constant dense<0.000000e+00> : vector<8x128xf32>
    %8 = tpu.matmul %3, %7, %cst {dimension_numbers = #tpu.dot_dimension_numbers<[1], [0], [0], [1], [0, 0, 1, 1], [], []>} : vector<8x128xf32>, vector<128x128xf32>, vector<8x128xf32> -> vector<8x128xf32>
    %9 = arith.addf %6, %8 : vector<8x128xf32>
    %10 = math.tanh %9 : vector<8x128xf32>
    %11 = arith.index_cast %c0_i32_2 : i32 to index
    %c0_7 = arith.constant 0 : index
    %c0_8 = arith.constant 0 : index
    %12 = vector.load %arg7[%11, %c0_7, %c0_8] : memref<8x8x128xf32, #tpu.memory_space<vmem>>, vector<1x8x128xf32>
    %13 = vector.shape_cast %12 : vector<1x8x128xf32> to vector<8x128xf32>
    %14 = vector.shape_cast %10 : vector<8x128xf32> to vector<1x8x128xf32>
    tpu.vector_store %arg7[%11, %c0_7, %c0_8], %14 {strides = array<i32>} : memref<8x8x128xf32, #tpu.memory_space<vmem>>, vector<1x8x128xf32>,
    %c1_i32 = arith.constant 1 : i32
    %15 = arith.index_cast %c1_i32 : i32 to index
    %c0_9 = arith.constant 0 : index
    %c0_10 = arith.constant 0 : index
    %16 = vector.load %arg1[%15, %c0_9, %c0_10] : memref<8x8x128xf32, #tpu.memory_space<vmem>>, vector<1x8x128xf32>
    %17 = vector.shape_cast %16 : vector<1x8x128xf32> to vector<8x128xf32>
    %c0_11 = arith.constant 0 : index
    %c0_12 = arith.constant 0 : index
    %18 = vector.load %arg2[%c0_11, %c0_12] : memref<128x128xf32, #tpu.memory_space<vmem>>, vector<128x128xf32>
    %cst_13 = arith.constant dense<0.000000e+00> : vector<8x128xf32>
    %19 = tpu.matmul %10, %18, %cst_13 {dimension_numbers = #tpu.dot_dimension_numbers<[1], [0], [0], [1], [0, 0, 1, 1], [], []>} : vector<8x128xf32>, vector<128x128xf32>, vector<8x128xf32> -> vector<8x128xf32>
    %20 = arith.addf %17, %19 : vector<8x128xf32>
    %21 = math.tanh %20 : vector<8x128xf32>
    %22 = arith.index_cast %c1_i32 : i32 to index
    %c0_14 = arith.constant 0 : index
    %c0_15 = arith.constant 0 : index
    %23 = vector.load %arg7[%22, %c0_14, %c0_15] : memref<8x8x128xf32, #tpu.memory_space<vmem>>, vector<1x8x128xf32>
    %24 = vector.shape_cast %23 : vector<1x8x128xf32> to vector<8x128xf32>
    %25 = vector.shape_cast %21 : vector<8x128xf32> to vector<1x8x128xf32>
    tpu.vector_store %arg7[%22, %c0_14, %c0_15], %25 {strides = array<i32>} : memref<8x8x128xf32, #tpu.memory_space<vmem>>, vector<1x8x128xf32>,
    %c2_i32 = arith.constant 2 : i32
    %26 = arith.index_cast %c2_i32 : i32 to index
    %c0_16 = arith.constant 0 : index
    %c0_17 = arith.constant 0 : index
    %27 = vector.load %arg1[%26, %c0_16, %c0_17] : memref<8x8x128xf32, #tpu.memory_space<vmem>>, vector<1x8x128xf32>
    %28 = vector.shape_cast %27 : vector<1x8x128xf32> to vector<8x128xf32>
    %c0_18 = arith.constant 0 : index
    %c0_19 = arith.constant 0 : index
    %29 = vector.load %arg2[%c0_18, %c0_19] : memref<128x128xf32, #tpu.memory_space<vmem>>, vector<128x128xf32>
    %cst_20 = arith.constant dense<0.000000e+00> : vector<8x128xf32>
    %30 = tpu.matmul %21, %29, %cst_20 {dimension_numbers = #tpu.dot_dimension_numbers<[1], [0], [0], [1], [0, 0, 1, 1], [], []>} : vector<8x128xf32>, vector<128x128xf32>, vector<8x128xf32> -> vector<8x128xf32>
    %31 = arith.addf %28, %30 : vector<8x128xf32>
    %32 = math.tanh %31 : vector<8x128xf32>
    %33 = arith.index_cast %c2_i32 : i32 to index
    %c0_21 = arith.constant 0 : index
    %c0_22 = arith.constant 0 : index
    %34 = vector.load %arg7[%33, %c0_21, %c0_22] : memref<8x8x128xf32, #tpu.memory_space<vmem>>, vector<1x8x128xf32>
    %35 = vector.shape_cast %34 : vector<1x8x128xf32> to vector<8x128xf32>
    %36 = vector.shape_cast %32 : vector<8x128xf32> to vector<1x8x128xf32>
    tpu.vector_store %arg7[%33, %c0_21, %c0_22], %36 {strides = array<i32>} : memref<8x8x128xf32, #tpu.memory_space<vmem>>, vector<1x8x128xf32>,
    %c3_i32 = arith.constant 3 : i32
    %37 = arith.index_cast %c3_i32 : i32 to index
    %c0_23 = arith.constant 0 : index
    %c0_24 = arith.constant 0 : index
    %38 = vector.load %arg1[%37, %c0_23, %c0_24] : memref<8x8x128xf32, #tpu.memory_space<vmem>>, vector<1x8x128xf32>
    %39 = vector.shape_cast %38 : vector<1x8x128xf32> to vector<8x128xf32>
    %c0_25 = arith.constant 0 : index
    %c0_26 = arith.constant 0 : index
    %40 = vector.load %arg2[%c0_25, %c0_26] : memref<128x128xf32, #tpu.memory_space<vmem>>, vector<128x128xf32>
    %cst_27 = arith.constant dense<0.000000e+00> : vector<8x128xf32>
    %41 = tpu.matmul %32, %40, %cst_27 {dimension_numbers = #tpu.dot_dimension_numbers<[1], [0], [0], [1], [0, 0, 1, 1], [], []>} : vector<8x128xf32>, vector<128x128xf32>, vector<8x128xf32> -> vector<8x128xf32>
    %42 = arith.addf %39, %41 : vector<8x128xf32>
    %43 = math.tanh %42 : vector<8x128xf32>
    %44 = arith.index_cast %c3_i32 : i32 to index
    %c0_28 = arith.constant 0 : index
    %c0_29 = arith.constant 0 : index
    %45 = vector.load %arg7[%44, %c0_28, %c0_29] : memref<8x8x128xf32, #tpu.memory_space<vmem>>, vector<1x8x128xf32>
    %46 = vector.shape_cast %45 : vector<1x8x128xf32> to vector<8x128xf32>
    %47 = vector.shape_cast %43 : vector<8x128xf32> to vector<1x8x128xf32>
    tpu.vector_store %arg7[%44, %c0_28, %c0_29], %47 {strides = array<i32>} : memref<8x8x128xf32, #tpu.memory_space<vmem>>, vector<1x8x128xf32>,
    %c4_i32 = arith.constant 4 : i32
    %48 = arith.index_cast %c4_i32 : i32 to index
    %c0_30 = arith.constant 0 : index
    %c0_31 = arith.constant 0 : index
    %49 = vector.load %arg1[%48, %c0_30, %c0_31] : memref<8x8x128xf32, #tpu.memory_space<vmem>>, vector<1x8x128xf32>
    %50 = vector.shape_cast %49 : vector<1x8x128xf32> to vector<8x128xf32>
    %c0_32 = arith.constant 0 : index
    %c0_33 = arith.constant 0 : index
    %51 = vector.load %arg2[%c0_32, %c0_33] : memref<128x128xf32, #tpu.memory_space<vmem>>, vector<128x128xf32>
    %cst_34 = arith.constant dense<0.000000e+00> : vector<8x128xf32>
    %52 = tpu.matmul %43, %51, %cst_34 {dimension_numbers = #tpu.dot_dimension_numbers<[1], [0], [0], [1], [0, 0, 1, 1], [], []>} : vector<8x128xf32>, vector<128x128xf32>, vector<8x128xf32> -> vector<8x128xf32>
    %53 = arith.addf %50, %52 : vector<8x128xf32>
    %54 = math.tanh %53 : vector<8x128xf32>
    %55 = arith.index_cast %c4_i32 : i32 to index
    %c0_35 = arith.constant 0 : index
    %c0_36 = arith.constant 0 : index
    %56 = vector.load %arg7[%55, %c0_35, %c0_36] : memref<8x8x128xf32, #tpu.memory_space<vmem>>, vector<1x8x128xf32>
    %57 = vector.shape_cast %56 : vector<1x8x128xf32> to vector<8x128xf32>
    %58 = vector.shape_cast %54 : vector<8x128xf32> to vector<1x8x128xf32>
    tpu.vector_store %arg7[%55, %c0_35, %c0_36], %58 {strides = array<i32>} : memref<8x8x128xf32, #tpu.memory_space<vmem>>, vector<1x8x128xf32>,
    %c5_i32 = arith.constant 5 : i32
    %59 = arith.index_cast %c5_i32 : i32 to index
    %c0_37 = arith.constant 0 : index
    %c0_38 = arith.constant 0 : index
    %60 = vector.load %arg1[%59, %c0_37, %c0_38] : memref<8x8x128xf32, #tpu.memory_space<vmem>>, vector<1x8x128xf32>
    %61 = vector.shape_cast %60 : vector<1x8x128xf32> to vector<8x128xf32>
    %c0_39 = arith.constant 0 : index
    %c0_40 = arith.constant 0 : index
    %62 = vector.load %arg2[%c0_39, %c0_40] : memref<128x128xf32, #tpu.memory_space<vmem>>, vector<128x128xf32>
    %cst_41 = arith.constant dense<0.000000e+00> : vector<8x128xf32>
    %63 = tpu.matmul %54, %62, %cst_41 {dimension_numbers = #tpu.dot_dimension_numbers<[1], [0], [0], [1], [0, 0, 1, 1], [], []>} : vector<8x128xf32>, vector<128x128xf32>, vector<8x128xf32> -> vector<8x128xf32>
    %64 = arith.addf %61, %63 : vector<8x128xf32>
    %65 = math.tanh %64 : vector<8x128xf32>
    %66 = arith.index_cast %c5_i32 : i32 to index
    %c0_42 = arith.constant 0 : index
    %c0_43 = arith.constant 0 : index
    %67 = vector.load %arg7[%66, %c0_42, %c0_43] : memref<8x8x128xf32, #tpu.memory_space<vmem>>, vector<1x8x128xf32>
    %68 = vector.shape_cast %67 : vector<1x8x128xf32> to vector<8x128xf32>
    %69 = vector.shape_cast %65 : vector<8x128xf32> to vector<1x8x128xf32>
    tpu.vector_store %arg7[%66, %c0_42, %c0_43], %69 {strides = array<i32>} : memref<8x8x128xf32, #tpu.memory_space<vmem>>, vector<1x8x128xf32>,
    %c6_i32 = arith.constant 6 : i32
    %70 = arith.index_cast %c6_i32 : i32 to index
    %c0_44 = arith.constant 0 : index
    %c0_45 = arith.constant 0 : index
    %71 = vector.load %arg1[%70, %c0_44, %c0_45] : memref<8x8x128xf32, #tpu.memory_space<vmem>>, vector<1x8x128xf32>
    %72 = vector.shape_cast %71 : vector<1x8x128xf32> to vector<8x128xf32>
    %c0_46 = arith.constant 0 : index
    %c0_47 = arith.constant 0 : index
    %73 = vector.load %arg2[%c0_46, %c0_47] : memref<128x128xf32, #tpu.memory_space<vmem>>, vector<128x128xf32>
    %cst_48 = arith.constant dense<0.000000e+00> : vector<8x128xf32>
    %74 = tpu.matmul %65, %73, %cst_48 {dimension_numbers = #tpu.dot_dimension_numbers<[1], [0], [0], [1], [0, 0, 1, 1], [], []>} : vector<8x128xf32>, vector<128x128xf32>, vector<8x128xf32> -> vector<8x128xf32>
    %75 = arith.addf %72, %74 : vector<8x128xf32>
    %76 = math.tanh %75 : vector<8x128xf32>
    %77 = arith.index_cast %c6_i32 : i32 to index
    %c0_49 = arith.constant 0 : index
    %c0_50 = arith.constant 0 : index
    %78 = vector.load %arg7[%77, %c0_49, %c0_50] : memref<8x8x128xf32, #tpu.memory_space<vmem>>, vector<1x8x128xf32>
    %79 = vector.shape_cast %78 : vector<1x8x128xf32> to vector<8x128xf32>
    %80 = vector.shape_cast %76 : vector<8x128xf32> to vector<1x8x128xf32>
    tpu.vector_store %arg7[%77, %c0_49, %c0_50], %80 {strides = array<i32>} : memref<8x8x128xf32, #tpu.memory_space<vmem>>, vector<1x8x128xf32>,
    %c7_i32 = arith.constant 7 : i32
    %81 = arith.index_cast %c7_i32 : i32 to index
    %c0_51 = arith.constant 0 : index
    %c0_52 = arith.constant 0 : index
    %82 = vector.load %arg1[%81, %c0_51, %c0_52] : memref<8x8x128xf32, #tpu.memory_space<vmem>>, vector<1x8x128xf32>
    %83 = vector.shape_cast %82 : vector<1x8x128xf32> to vector<8x128xf32>
    %c0_53 = arith.constant 0 : index
    %c0_54 = arith.constant 0 : index
    %84 = vector.load %arg2[%c0_53, %c0_54] : memref<128x128xf32, #tpu.memory_space<vmem>>, vector<128x128xf32>
    %cst_55 = arith.constant dense<0.000000e+00> : vector<8x128xf32>
    %85 = tpu.matmul %76, %84, %cst_55 {dimension_numbers = #tpu.dot_dimension_numbers<[1], [0], [0], [1], [0, 0, 1, 1], [], []>} : vector<8x128xf32>, vector<128x128xf32>, vector<8x128xf32> -> vector<8x128xf32>
    %86 = arith.addf %83, %85 : vector<8x128xf32>
    %87 = math.tanh %86 : vector<8x128xf32>
    %88 = arith.index_cast %c7_i32 : i32 to index
    %c0_56 = arith.constant 0 : index
    %c0_57 = arith.constant 0 : index
    %89 = vector.load %arg7[%88, %c0_56, %c0_57] : memref<8x8x128xf32, #tpu.memory_space<vmem>>, vector<1x8x128xf32>
    %90 = vector.shape_cast %89 : vector<1x8x128xf32> to vector<8x128xf32>
    %91 = vector.shape_cast %87 : vector<8x128xf32> to vector<1x8x128xf32>
    tpu.vector_store %arg7[%88, %c0_56, %c0_57], %91 {strides = array<i32>} : memref<8x8x128xf32, #tpu.memory_space<vmem>>, vector<1x8x128xf32>,
    %c8_i32 = arith.constant 8 : i32
    %c0_58 = arith.constant 0 : index
    %c0_59 = arith.constant 0 : index
    %92 = vector.load %arg9[%c0_58, %c0_59] : memref<8x128xf32, #tpu.memory_space<vmem>>, vector<8x128xf32>
    tpu.vector_store %arg9[%c0_58, %c0_59], %87 {strides = array<i32>} : memref<8x128xf32, #tpu.memory_space<vmem>>, vector<8x128xf32>,
    %c0_60 = arith.constant 0 : index
    %c0_61 = arith.constant 0 : index
    %c0_62 = arith.constant 0 : index
    %93 = vector.load %arg7[%c0_60, %c0_61, %c0_62] : memref<8x8x128xf32, #tpu.memory_space<vmem>>, vector<8x8x128xf32>
    %94 = vector.shape_cast %93 : vector<8x8x128xf32> to vector<64x128xf32>
    %c0_63 = arith.constant 0 : index
    %c0_64 = arith.constant 0 : index
    %95 = vector.load %arg3[%c0_63, %c0_64] : memref<128x128xf32, #tpu.memory_space<vmem>>, vector<128x128xf32>
    %cst_65 = arith.constant dense<0.000000e+00> : vector<64x128xf32>
    %96 = tpu.matmul %94, %95, %cst_65 {dimension_numbers = #tpu.dot_dimension_numbers<[1], [0], [0], [1], [0, 0, 1, 1], [], []>} : vector<64x128xf32>, vector<128x128xf32>, vector<64x128xf32> -> vector<64x128xf32>
    %c0_66 = arith.constant 0 : index
    %c0_67 = arith.constant 0 : index
    %97 = vector.load %arg4[%c0_66, %c0_67] : memref<1x128xf32, #tpu.memory_space<vmem>>, vector<1x128xf32>
    %98 = vector.broadcast %97 : vector<1x128xf32> to vector<64x128xf32>
    %99 = arith.addf %96, %98 : vector<64x128xf32>
    %100 = arith.negf %99 : vector<64x128xf32>
    %101 = math.exp %100 : vector<64x128xf32>
    %cst_68 = arith.constant 1.000000e+00 : f32
    %102 = vector.broadcast %cst_68 : f32 to vector<64x128xf32>
    %103 = arith.addf %102, %101 : vector<64x128xf32>
    %104 = arith.divf %102, %103 : vector<64x128xf32>
    %c0_69 = arith.constant 0 : index
    %c0_70 = arith.constant 0 : index
    %105 = vector.load %arg5[%c0_69, %c0_70] : memref<128x128xf32, #tpu.memory_space<vmem>>, vector<128x128xf32>
    %cst_71 = arith.constant dense<0.000000e+00> : vector<64x128xf32>
    %106 = tpu.matmul %104, %105, %cst_71 {dimension_numbers = #tpu.dot_dimension_numbers<[1], [0], [0], [1], [0, 0, 1, 1], [], []>} : vector<64x128xf32>, vector<128x128xf32>, vector<64x128xf32> -> vector<64x128xf32>
    %c0_72 = arith.constant 0 : index
    %c0_73 = arith.constant 0 : index
    %107 = vector.load %arg6[%c0_72, %c0_73] : memref<1x128xf32, #tpu.memory_space<vmem>>, vector<1x128xf32>
    %108 = vector.broadcast %107 : vector<1x128xf32> to vector<64x128xf32>
    %109 = arith.addf %106, %108 : vector<64x128xf32>
    %110 = vector.shape_cast %109 : vector<64x128xf32> to vector<8x8x128xf32>
    %c0_74 = arith.constant 0 : index
    %c0_75 = arith.constant 0 : index
    %c0_76 = arith.constant 0 : index
    %111 = vector.load %arg8[%c0_74, %c0_75, %c0_76] : memref<8x8x128xf32, #tpu.memory_space<vmem>>, vector<8x8x128xf32>
    tpu.vector_store %arg8[%c0_74, %c0_75, %c0_76], %110 {strides = array<i32>} : memref<8x8x128xf32, #tpu.memory_space<vmem>>, vector<8x8x128xf32>,
    return
  }
  func.func @transform_0(%arg0: i32) -> (i32, i32, i32) {
    %c0_i32 = arith.constant 0 : i32
    %c0_i32_0 = arith.constant 0 : i32
    %c0_i32_1 = arith.constant 0 : i32
    return %arg0, %c0_i32, %c0_i32_0 : i32, i32, i32
  }
  func.func @transform_1(%arg0: i32) -> (i32, i32) {
    %c0_i32 = arith.constant 0 : i32
    %c0_i32_0 = arith.constant 0 : i32
    %c0_i32_1 = arith.constant 0 : i32
    return %c0_i32, %c0_i32_0 : i32, i32
  }
  func.func @transform_2(%arg0: i32) -> (i32, i32) {
    %c0_i32 = arith.constant 0 : i32
    %c0_i32_0 = arith.constant 0 : i32
    %c0_i32_1 = arith.constant 0 : i32
    return %c0_i32, %c0_i32_0 : i32, i32
  }
  func.func @transform_3(%arg0: i32) -> (i32, i32) {
    %c0_i32 = arith.constant 0 : i32
    %c0_i32_0 = arith.constant 0 : i32
    %c0_i32_1 = arith.constant 0 : i32
    return %c0_i32, %c0_i32_0 : i32, i32
  }
  func.func @transform_4(%arg0: i32) -> (i32, i32) {
    %c0_i32 = arith.constant 0 : i32
    %c0_i32_0 = arith.constant 0 : i32
    %c0_i32_1 = arith.constant 0 : i32
    return %c0_i32, %c0_i32_0 : i32, i32
  }
  func.func @transform_5(%arg0: i32) -> (i32, i32) {
    %c0_i32 = arith.constant 0 : i32
    %c0_i32_0 = arith.constant 0 : i32
    %c0_i32_1 = arith.constant 0 : i32
    return %c0_i32, %c0_i32_0 : i32, i32
  }
  func.func @transform_6(%arg0: i32) -> (i32, i32, i32) {
    %c0_i32 = arith.constant 0 : i32
    %c0_i32_0 = arith.constant 0 : i32
    %c0_i32_1 = arith.constant 0 : i32
    return %arg0, %c0_i32, %c0_i32_0 : i32, i32, i32
  }
  func.func @transform_7(%arg0: i32) -> (i32, i32, i32) {
    %c0_i32 = arith.constant 0 : i32
    %c0_i32_0 = arith.constant 0 : i32
    %c0_i32_1 = arith.constant 0 : i32
    return %arg0, %c0_i32, %c0_i32_0 : i32, i32, i32
  }
}

</mosaic_0001>

<llo_original>
// kernel: autoencoder_rnn_forward.2
$region0: #{autoencoder_rnn_forward.2}
  #allocation0 [shape = 'u32[]', space=smem, size = 0x4, offset = 0x4, fixed_abs, tag = 'smem constant byte address 0x4 - core index']
  #allocation1 [shape = 'u32[144,128]{1,0:T(1,128)}', space=vmem, size = 0x12000, scoped, tag = 'internal scratch']
  %s0 = inlined_call_operand.vmem [shape: f32[8,8,128], index: 0, kind: input, shape index: {}]
  %s1 = inlined_call_operand.vmem [shape: f32[128,128], index: 1, kind: input, shape index: {}]
  %s2 = inlined_call_operand.vmem [shape: f32[1,128], index: 2, kind: input, shape index: {}]
  %s3 = inlined_call_operand.vmem [shape: f32[128,128], index: 3, kind: input, shape index: {}]
  %s4 = inlined_call_operand.vmem [shape: f32[1,128], index: 4, kind: input, shape index: {}]
  %s5 = inlined_call_operand.vmem [shape: f32[128,128], index: 5, kind: input, shape index: {}]
  %s6 = inlined_call_operand.vmem [shape: f32[1,128], index: 6, kind: input, shape index: {}]
  %s7 = inlined_call_operand.vmem [shape: f32[8,8,128], index: 7, kind: output, shape index: {}]
  %s8 = sld [smem:[#allocation0]]
  $region38: #{autoencoder_rnn_forward.2} parent=0
    _
  %s10 = ssub.s32 1, %s8
  %s11 = scalar_select 0, %s10, %s8
  // Predicated region
  $region2: #{autoencoder_rnn_forward.2} parent=0 // pred_check
    _
  $region3: #{autoencoder_rnn_forward.2} parent=0 // pred_check_branch
    %13 = sbr.rel (0) target = $region5
  $region4: #{autoencoder_rnn_forward.2} parent=0 // pred_region
    _
  $region5: #{autoencoder_rnn_forward.2} parent=0 // pred_fallthru
    _
  // Predicated region
  $region6: #{autoencoder_rnn_forward.2} parent=0 // pred_check
    _
  $region7: #{autoencoder_rnn_forward.2} parent=0 // pred_check_branch
    %15 = sbr.rel (0) target = $region9
  $region8: #{autoencoder_rnn_forward.2} parent=0 // pred_region
    _
  $region9: #{autoencoder_rnn_forward.2} parent=0 // pred_fallthru
    _
  // Predicated region
  $region10: #{autoencoder_rnn_forward.2} parent=0 // pred_check
    _
  $region11: #{autoencoder_rnn_forward.2} parent=0 // pred_check_branch
    %17 = sbr.rel (0) target = $region13
  $region12: #{autoencoder_rnn_forward.2} parent=0 // pred_region
    _
  $region13: #{autoencoder_rnn_forward.2} parent=0 // pred_fallthru
    _
  // Predicated region
  $region14: #{autoencoder_rnn_forward.2} parent=0 // pred_check
    _
  $region15: #{autoencoder_rnn_forward.2} parent=0 // pred_check_branch
    %19 = sbr.rel (0) target = $region17
  $region16: #{autoencoder_rnn_forward.2} parent=0 // pred_region
    _
  $region17: #{autoencoder_rnn_forward.2} parent=0 // pred_fallthru
    _
  // Predicated region
  $region18: #{autoencoder_rnn_forward.2} parent=0 // pred_check
    _
  $region19: #{autoencoder_rnn_forward.2} parent=0 // pred_check_branch
    %21 = sbr.rel (0) target = $region21
  $region20: #{autoencoder_rnn_forward.2} parent=0 // pred_region
    _
  $region21: #{autoencoder_rnn_forward.2} parent=0 // pred_fallthru
    _
  // Predicated region
  $region22: #{autoencoder_rnn_forward.2} parent=0 // pred_check
    _
  $region23: #{autoencoder_rnn_forward.2} parent=0 // pred_check_branch
    %23 = sbr.rel (0) target = $region25
  $region24: #{autoencoder_rnn_forward.2} parent=0 // pred_region
    _
  $region25: #{autoencoder_rnn_forward.2} parent=0 // pred_fallthru
    _
  // Predicated region
  $region26: #{autoencoder_rnn_forward.2} parent=0 // pred_check
    _
  $region27: #{autoencoder_rnn_forward.2} parent=0 // pred_check_branch
    %25 = sbr.rel (0) target = $region29
  $region28: #{autoencoder_rnn_forward.2} parent=0 // pred_region
    _
  $region29: #{autoencoder_rnn_forward.2} parent=0 // pred_fallthru
    _
  %v26 = vld [vmem:[%s0] sm:$0xff]
  %v27 = vld [vmem:[%s0 + $0x8] sm:$0xff]
  %v28 = vld [vmem:[%s0 + $0x10] sm:$0xff]
  %v29 = vld [vmem:[%s0 + $0x18] sm:$0xff]
  %v30 = vld [vmem:[%s0 + $0x20] sm:$0xff]
  %v31 = vld [vmem:[%s0 + $0x28] sm:$0xff]
  %v32 = vld [vmem:[%s0 + $0x30] sm:$0xff]
  %v33 = vld [vmem:[%s0 + $0x38] sm:$0xff]
  %v34 = vld [vmem:[%s1] sm:$0xff]
  %v35 = vld [vmem:[%s1 + $0x8] sm:$0xff]
  %v36 = vld [vmem:[%s1 + $0x10] sm:$0xff]
  %v37 = vld [vmem:[%s1 + $0x18] sm:$0xff]
  %v38 = vld [vmem:[%s1 + $0x20] sm:$0xff]
  %v39 = vld [vmem:[%s1 + $0x28] sm:$0xff]
  %v40 = vld [vmem:[%s1 + $0x30] sm:$0xff]
  %v41 = vld [vmem:[%s1 + $0x38] sm:$0xff]
  %v42 = vld [vmem:[%s1 + $0x40] sm:$0xff]
  %v43 = vld [vmem:[%s1 + $0x48] sm:$0xff]
  %v44 = vld [vmem:[%s1 + $0x50] sm:$0xff]
  %v45 = vld [vmem:[%s1 + $0x58] sm:$0xff]
  %v46 = vld [vmem:[%s1 + $0x60] sm:$0xff]
  %v47 = vld [vmem:[%s1 + $0x68] sm:$0xff]
  %v48 = vld [vmem:[%s1 + $0x70] sm:$0xff]
  %v49 = vld [vmem:[%s1 + $0x78] sm:$0xff]
  %v50 = vld [vmem:[%s2] sm:$0x1]
  %v52 = vlaneseq
  %v53 = vshrl.u32 %v52, 7
  %v54 = vsub.s32 0, %v53
  %v55 = vrot.slane %v50, %v54
  %57 = vmatprep.subr.mxu0 0.0
  %58 = vmatpush1.msra.mxu0 %v34
  %59 = vmatprep.subr.mxu0 0.0
  %60 = vmatpush1.msra.mxu0 %v35
  %61 = vmatprep.subr.mxu0 0.0
  %62 = vmatpush1.msra.mxu0 %v36
  %63 = vmatprep.subr.mxu0 0.0
  %64 = vmatpush1.msra.mxu0 %v37
  %65 = vmatprep.subr.mxu0 0.0
  %66 = vmatpush1.msra.mxu0 %v38
  %67 = vmatprep.subr.mxu0 0.0
  %68 = vmatpush1.msra.mxu0 %v39
  %69 = vmatprep.subr.mxu0 0.0
  %70 = vmatpush1.msra.mxu0 %v40
  %71 = vmatprep.subr.mxu0 0.0
  %72 = vmatpush1.msra.mxu0 %v41
  %73 = vmatprep.subr.mxu0 0.0
  %74 = vmatpush1.msra.mxu0 %v42
  %75 = vmatprep.subr.mxu0 0.0
  %76 = vmatpush1.msra.mxu0 %v43
  %77 = vmatprep.subr.mxu0 0.0
  %78 = vmatpush1.msra.mxu0 %v44
  %79 = vmatprep.subr.mxu0 0.0
  %80 = vmatpush1.msra.mxu0 %v45
  %81 = vmatprep.subr.mxu0 0.0
  %82 = vmatpush1.msra.mxu0 %v46
  %83 = vmatprep.subr.mxu0 0.0
  %84 = vmatpush1.msra.mxu0 %v47
  %85 = vmatprep.subr.mxu0 0.0
  %86 = vmatpush1.msra.mxu0 %v48
  %87 = vmatprep.subr.mxu0 0.0
  %88 = vmatpush1.msra.mxu0 %v49
  %89 = vmatprep.subr.mxu0 0.0
  %90 = vmatpush1.msra.mxu0 0.0
  %91 = vmatprep.subr.mxu0 0.0
  %92 = vmatpush1.msra.mxu0 0.0
  %93 = vmatprep.subr.mxu0 0.0
  %94 = vmatpush1.msra.mxu0 0.0
  %95 = vmatprep.subr.mxu0 0.0
  %96 = vmatpush1.msra.mxu0 0.0
  %97 = vmatprep.subr.mxu0 0.0
  %98 = vmatpush1.msra.mxu0 0.0
  %99 = vmatprep.subr.mxu0 0.0
  %100 = vmatpush1.msra.mxu0 0.0
  %101 = vmatprep.subr.mxu0 0.0
  %102 = vmatpush1.msra.mxu0 0.0
  %103 = vmatprep.subr.mxu0 0.0
  %104 = vmatpush1.msra.mxu0 0.0
  %105 = vmatprep.subr.mxu0 0.0
  %106 = vmatpush1.msra.mxu0 0.0
  %107 = vmatprep.subr.mxu0 0.0
  %108 = vmatpush1.msra.mxu0 0.0
  %109 = vmatprep.subr.mxu0 0.0
  %110 = vmatpush1.msra.mxu0 0.0
  %111 = vmatprep.subr.mxu0 0.0
  %112 = vmatpush1.msra.mxu0 0.0
  %113 = vmatprep.subr.mxu0 0.0
  %114 = vmatpush1.msra.mxu0 0.0
  %115 = vmatprep.subr.mxu0 0.0
  %116 = vmatpush1.msra.mxu0 0.0
  %117 = vmatprep.subr.mxu0 0.0
  %118 = vmatpush1.msra.mxu0 0.0
  %119 = vmatprep.subr.mxu0 0.0
  %120 = vmatpush1.msra.mxu0 0.0
  %121 = vmatprep.mubr.f32.mxu0 0.0
  %122 = vmatmul.mubr.f32.gmra.mrb[0].mxu0 %v26
  %v123 = vpop.f32.mrb[0].mxu0
  %v124 = vadd.f32 %v55, %v123
  %v125 = vpop.f32.mrb[0].mxu0
  %126 = vmatprep.mubr.f32.mxu0 0.0
  %127 = vmatmul.mubr.f32.gmra.mrb[0].mxu0 %v27
  %v128 = vpop.f32.mrb[0].mxu0
  %v129 = vadd.f32 %v55, %v128
  %v130 = vpop.f32.mrb[0].mxu0
  %131 = vmatprep.mubr.f32.mxu0 0.0
  %132 = vmatmul.mubr.f32.gmra.mrb[0].mxu0 %v28
  %v133 = vpop.f32.mrb[0].mxu0
  %v134 = vadd.f32 %v55, %v133
  %v135 = vpop.f32.mrb[0].mxu0
  %136 = vmatprep.mubr.f32.mxu0 0.0
  %137 = vmatmul.mubr.f32.gmra.mrb[0].mxu0 %v29
  %v138 = vpop.f32.mrb[0].mxu0
  %v139 = vadd.f32 %v55, %v138
  %v140 = vpop.f32.mrb[0].mxu0
  %141 = vmatprep.mubr.f32.mxu0 0.0
  %142 = vmatmul.mubr.f32.gmra.mrb[0].mxu0 %v30
  %v143 = vpop.f32.mrb[0].mxu0
  %v144 = vadd.f32 %v55, %v143
  %v145 = vpop.f32.mrb[0].mxu0
  %146 = vmatprep.mubr.f32.mxu0 0.0
  %147 = vmatmul.mubr.f32.gmra.mrb[0].mxu0 %v31
  %v148 = vpop.f32.mrb[0].mxu0
  %v149 = vadd.f32 %v55, %v148
  %v150 = vpop.f32.mrb[0].mxu0
  %151 = vmatprep.mubr.f32.mxu0 0.0
  %152 = vmatmul.mubr.f32.gmra.mrb[0].mxu0 %v32
  %v153 = vpop.f32.mrb[0].mxu0
  %v154 = vadd.f32 %v55, %v153
  %v155 = vpop.f32.mrb[0].mxu0
  %156 = vmatprep.mubr.f32.mxu0 0.0
  %157 = vmatmul.mubr.f32.gmra.mrb[0].mxu0 %v33
  %v158 = vpop.f32.mrb[0].mxu0
  %v159 = vadd.f32 %v55, %v158
  %v160 = vpop.f32.mrb[0].mxu0
  %161 = vdwg.mxu0
  %v162 = vxor.u32 %v124, 2147483648
  %v163 = vxor.u32 %v129, 2147483648
  %v164 = vxor.u32 %v134, 2147483648
  %v165 = vxor.u32 %v139, 2147483648
  %v166 = vxor.u32 %v144, 2147483648
  %v167 = vxor.u32 %v149, 2147483648
  %v168 = vxor.u32 %v154, 2147483648
  %v169 = vxor.u32 %v159, 2147483648
  %v170 = vmul.f32 %v162, 1.442695
  %v171 = vpow.pop %v170
  %v172 = vmul.f32 %v163, 1.442695
  %v173 = vpow.pop %v172
  %v174 = vmul.f32 %v164, 1.442695
  %v175 = vpow.pop %v174
  %v176 = vmul.f32 %v165, 1.442695
  %v177 = vpow.pop %v176
  %v178 = vmul.f32 %v166, 1.442695
  %v179 = vpow.pop %v178
  %v180 = vmul.f32 %v167, 1.442695
  %v181 = vpow.pop %v180
  %v182 = vmul.f32 %v168, 1.442695
  %v183 = vpow.pop %v182
  %v184 = vmul.f32 %v169, 1.442695
  %v185 = vpow.pop %v184
  %v186 = vadd.f32 %v171, 1.0
  %v187 = vadd.f32 %v173, 1.0
  %v188 = vadd.f32 %v175, 1.0
  %v189 = vadd.f32 %v177, 1.0
  %v190 = vadd.f32 %v179, 1.0
  %v191 = vadd.f32 %v181, 1.0
  %v192 = vadd.f32 %v183, 1.0
  %v193 = vadd.f32 %v185, 1.0
  %v194 = vrcp.pop %v186
  %v195 = vmul.f32 1.0, %v194
  %v196 = vrcp.pop %v187
  %v197 = vmul.f32 1.0, %v196
  %v198 = vrcp.pop %v188
  %v199 = vmul.f32 1.0, %v198
  %v200 = vrcp.pop %v189
  %v201 = vmul.f32 1.0, %v200
  %v202 = vrcp.pop %v190
  %v203 = vmul.f32 1.0, %v202
  %v204 = vrcp.pop %v191
  %v205 = vmul.f32 1.0, %v204
  %v206 = vrcp.pop %v192
  %v207 = vmul.f32 1.0, %v206
  %v208 = vrcp.pop %v193
  %v209 = vmul.f32 1.0, %v208
  %v210 = vld [vmem:[%s3] sm:$0xff]
  %v211 = vld [vmem:[%s3 + $0x8] sm:$0xff]
  %v212 = vld [vmem:[%s3 + $0x10] sm:$0xff]
  %v213 = vld [vmem:[%s3 + $0x18] sm:$0xff]
  %v214 = vld [vmem:[%s3 + $0x20] sm:$0xff]
  %v215 = vld [vmem:[%s3 + $0x28] sm:$0xff]
  %v216 = vld [vmem:[%s3 + $0x30] sm:$0xff]
  %v217 = vld [vmem:[%s3 + $0x38] sm:$0xff]
  %v218 = vld [vmem:[%s3 + $0x40] sm:$0xff]
  %v219 = vld [vmem:[%s3 + $0x48] sm:$0xff]
  %v220 = vld [vmem:[%s3 + $0x50] sm:$0xff]
  %v221 = vld [vmem:[%s3 + $0x58] sm:$0xff]
  %v222 = vld [vmem:[%s3 + $0x60] sm:$0xff]
  %v223 = vld [vmem:[%s3 + $0x68] sm:$0xff]
  %v224 = vld [vmem:[%s3 + $0x70] sm:$0xff]
  %v225 = vld [vmem:[%s3 + $0x78] sm:$0xff]
  %v226 = vld [vmem:[%s4] sm:$0x1]
  %v228 = vlaneseq
  %v229 = vshrl.u32 %v228, 7
  %v230 = vsub.s32 0, %v229
  %v231 = vrot.slane %v226, %v230
  %233 = vmatprep.subr.mxu0 0.0
  %234 = vmatpush1.msra.mxu0 %v210
  %235 = vmatprep.subr.mxu0 0.0
  %236 = vmatpush1.msra.mxu0 %v211
  %237 = vmatprep.subr.mxu0 0.0
  %238 = vmatpush1.msra.mxu0 %v212
  %239 = vmatprep.subr.mxu0 0.0
  %240 = vmatpush1.msra.mxu0 %v213
  %241 = vmatprep.subr.mxu0 0.0
  %242 = vmatpush1.msra.mxu0 %v214
  %243 = vmatprep.subr.mxu0 0.0
  %244 = vmatpush1.msra.mxu0 %v215
  %245 = vmatprep.subr.mxu0 0.0
  %246 = vmatpush1.msra.mxu0 %v216
  %247 = vmatprep.subr.mxu0 0.0
  %248 = vmatpush1.msra.mxu0 %v217
  %249 = vmatprep.subr.mxu0 0.0
  %250 = vmatpush1.msra.mxu0 %v218
  %251 = vmatprep.subr.mxu0 0.0
  %252 = vmatpush1.msra.mxu0 %v219
  %253 = vmatprep.subr.mxu0 0.0
  %254 = vmatpush1.msra.mxu0 %v220
  %255 = vmatprep.subr.mxu0 0.0
  %256 = vmatpush1.msra.mxu0 %v221
  %257 = vmatprep.subr.mxu0 0.0
  %258 = vmatpush1.msra.mxu0 %v222
  %259 = vmatprep.subr.mxu0 0.0
  %260 = vmatpush1.msra.mxu0 %v223
  %261 = vmatprep.subr.mxu0 0.0
  %262 = vmatpush1.msra.mxu0 %v224
  %263 = vmatprep.subr.mxu0 0.0
  %264 = vmatpush1.msra.mxu0 %v225
  %265 = vmatprep.subr.mxu0 0.0
  %266 = vmatpush1.msra.mxu0 0.0
  %267 = vmatprep.subr.mxu0 0.0
  %268 = vmatpush1.msra.mxu0 0.0
  %269 = vmatprep.subr.mxu0 0.0
  %270 = vmatpush1.msra.mxu0 0.0
  %271 = vmatprep.subr.mxu0 0.0
  %272 = vmatpush1.msra.mxu0 0.0
  %273 = vmatprep.subr.mxu0 0.0
  %274 = vmatpush1.msra.mxu0 0.0
  %275 = vmatprep.subr.mxu0 0.0
  %276 = vmatpush1.msra.mxu0 0.0
  %277 = vmatprep.subr.mxu0 0.0
  %278 = vmatpush1.msra.mxu0 0.0
  %279 = vmatprep.subr.mxu0 0.0
  %280 = vmatpush1.msra.mxu0 0.0
  %281 = vmatprep.subr.mxu0 0.0
  %282 = vmatpush1.msra.mxu0 0.0
  %283 = vmatprep.subr.mxu0 0.0
  %284 = vmatpush1.msra.mxu0 0.0
  %285 = vmatprep.subr.mxu0 0.0
  %286 = vmatpush1.msra.mxu0 0.0
  %287 = vmatprep.subr.mxu0 0.0
  %288 = vmatpush1.msra.mxu0 0.0
  %289 = vmatprep.subr.mxu0 0.0
  %290 = vmatpush1.msra.mxu0 0.0
  %291 = vmatprep.subr.mxu0 0.0
  %292 = vmatpush1.msra.mxu0 0.0
  %293 = vmatprep.subr.mxu0 0.0
  %294 = vmatpush1.msra.mxu0 0.0
  %295 = vmatprep.subr.mxu0 0.0
  %296 = vmatpush1.msra.mxu0 0.0
  %297 = vmatprep.mubr.f32.mxu0 0.0
  %298 = vmatmul.mubr.f32.gmra.mrb[0].mxu0 %v195
  %v299 = vpop.f32.mrb[0].mxu0
  %v300 = vadd.f32 %v231, %v299
  %v301 = vpop.f32.mrb[0].mxu0
  %302 = vmatprep.mubr.f32.mxu0 0.0
  %303 = vmatmul.mubr.f32.gmra.mrb[0].mxu0 %v197
  %v304 = vpop.f32.mrb[0].mxu0
  %v305 = vadd.f32 %v231, %v304
  %v306 = vpop.f32.mrb[0].mxu0
  %307 = vmatprep.mubr.f32.mxu0 0.0
  %308 = vmatmul.mubr.f32.gmra.mrb[0].mxu0 %v199
  %v309 = vpop.f32.mrb[0].mxu0
  %v310 = vadd.f32 %v231, %v309
  %v311 = vpop.f32.mrb[0].mxu0
  %312 = vmatprep.mubr.f32.mxu0 0.0
  %313 = vmatmul.mubr.f32.gmra.mrb[0].mxu0 %v201
  %v314 = vpop.f32.mrb[0].mxu0
  %v315 = vadd.f32 %v231, %v314
  %v316 = vpop.f32.mrb[0].mxu0
  %317 = vmatprep.mubr.f32.mxu0 0.0
  %318 = vmatmul.mubr.f32.gmra.mrb[0].mxu0 %v203
  %v319 = vpop.f32.mrb[0].mxu0
  %v320 = vadd.f32 %v231, %v319
  %v321 = vpop.f32.mrb[0].mxu0
  %322 = vmatprep.mubr.f32.mxu0 0.0
  %323 = vmatmul.mubr.f32.gmra.mrb[0].mxu0 %v205
  %v324 = vpop.f32.mrb[0].mxu0
  %v325 = vadd.f32 %v231, %v324
  %v326 = vpop.f32.mrb[0].mxu0
  %327 = vmatprep.mubr.f32.mxu0 0.0
  %328 = vmatmul.mubr.f32.gmra.mrb[0].mxu0 %v207
  %v329 = vpop.f32.mrb[0].mxu0
  %v330 = vadd.f32 %v231, %v329
  %v331 = vpop.f32.mrb[0].mxu0
  %332 = vmatprep.mubr.f32.mxu0 0.0
  %333 = vmatmul.mubr.f32.gmra.mrb[0].mxu0 %v209
  %v334 = vpop.f32.mrb[0].mxu0
  %v335 = vadd.f32 %v231, %v334
  %v336 = vpop.f32.mrb[0].mxu0
  %337 = vdwg.mxu0
  %v338 = vxor.u32 %v300, 2147483648
  %v339 = vxor.u32 %v305, 2147483648
  %v340 = vxor.u32 %v310, 2147483648
  %v341 = vxor.u32 %v315, 2147483648
  %v342 = vxor.u32 %v320, 2147483648
  %v343 = vxor.u32 %v325, 2147483648
  %v344 = vxor.u32 %v330, 2147483648
  %v345 = vxor.u32 %v335, 2147483648
  %v346 = vmul.f32 %v338, 1.442695
  %v347 = vpow.pop %v346
  %v348 = vmul.f32 %v339, 1.442695
  %v349 = vpow.pop %v348
  %v350 = vmul.f32 %v340, 1.442695
  %v351 = vpow.pop %v350
  %v352 = vmul.f32 %v341, 1.442695
  %v353 = vpow.pop %v352
  %v354 = vmul.f32 %v342, 1.442695
  %v355 = vpow.pop %v354
  %v356 = vmul.f32 %v343, 1.442695
  %v357 = vpow.pop %v356
  %v358 = vmul.f32 %v344, 1.442695
  %v359 = vpow.pop %v358
  %v360 = vmul.f32 %v345, 1.442695
  %v361 = vpow.pop %v360
  %v362 = vadd.f32 %v347, 1.0
  %v363 = vadd.f32 %v349, 1.0
  %v364 = vadd.f32 %v351, 1.0
  %v365 = vadd.f32 %v353, 1.0
  %v366 = vadd.f32 %v355, 1.0
  %v367 = vadd.f32 %v357, 1.0
  %v368 = vadd.f32 %v359, 1.0
  %v369 = vadd.f32 %v361, 1.0
  %v370 = vrcp.pop %v362
  %v371 = vmul.f32 1.0, %v370
  %v372 = vrcp.pop %v363
  %v373 = vmul.f32 1.0, %v372
  %v374 = vrcp.pop %v364
  %v375 = vmul.f32 1.0, %v374
  %v376 = vrcp.pop %v365
  %v377 = vmul.f32 1.0, %v376
  %v378 = vrcp.pop %v366
  %v379 = vmul.f32 1.0, %v378
  %v380 = vrcp.pop %v367
  %v381 = vmul.f32 1.0, %v380
  %v382 = vrcp.pop %v368
  %v383 = vmul.f32 1.0, %v382
  %v384 = vrcp.pop %v369
  %v385 = vmul.f32 1.0, %v384
  %v386 = vld [vmem:[%s5] sm:$0xff]
  %v387 = vld [vmem:[%s5 + $0x8] sm:$0xff]
  %v388 = vld [vmem:[%s5 + $0x10] sm:$0xff]
  %v389 = vld [vmem:[%s5 + $0x18] sm:$0xff]
  %v390 = vld [vmem:[%s5 + $0x20] sm:$0xff]
  %v391 = vld [vmem:[%s5 + $0x28] sm:$0xff]
  %v392 = vld [vmem:[%s5 + $0x30] sm:$0xff]
  %v393 = vld [vmem:[%s5 + $0x38] sm:$0xff]
  %v394 = vld [vmem:[%s5 + $0x40] sm:$0xff]
  %v395 = vld [vmem:[%s5 + $0x48] sm:$0xff]
  %v396 = vld [vmem:[%s5 + $0x50] sm:$0xff]
  %v397 = vld [vmem:[%s5 + $0x58] sm:$0xff]
  %v398 = vld [vmem:[%s5 + $0x60] sm:$0xff]
  %v399 = vld [vmem:[%s5 + $0x68] sm:$0xff]
  %v400 = vld [vmem:[%s5 + $0x70] sm:$0xff]
  %v401 = vld [vmem:[%s5 + $0x78] sm:$0xff]
  %v402 = vld [vmem:[%s6] sm:$0x1]
  %v404 = vlaneseq
  %v405 = vshrl.u32 %v404, 7
  %v406 = vsub.s32 0, %v405
  %v407 = vrot.slane %v402, %v406
  %409 = vmatprep.subr.mxu0 0.0
  %410 = vmatpush1.msra.mxu0 %v386
  %411 = vmatprep.subr.mxu0 0.0
  %412 = vmatpush1.msra.mxu0 %v387
  %413 = vmatprep.subr.mxu0 0.0
  %414 = vmatpush1.msra.mxu0 %v388
  %415 = vmatprep.subr.mxu0 0.0
  %416 = vmatpush1.msra.mxu0 %v389
  %417 = vmatprep.subr.mxu0 0.0
  %418 = vmatpush1.msra.mxu0 %v390
  %419 = vmatprep.subr.mxu0 0.0
  %420 = vmatpush1.msra.mxu0 %v391
  %421 = vmatprep.subr.mxu0 0.0
  %422 = vmatpush1.msra.mxu0 %v392
  %423 = vmatprep.subr.mxu0 0.0
  %424 = vmatpush1.msra.mxu0 %v393
  %425 = vmatprep.subr.mxu0 0.0
  %426 = vmatpush1.msra.mxu0 %v394
  %427 = vmatprep.subr.mxu0 0.0
  %428 = vmatpush1.msra.mxu0 %v395
  %429 = vmatprep.subr.mxu0 0.0
  %430 = vmatpush1.msra.mxu0 %v396
  %431 = vmatprep.subr.mxu0 0.0
  %432 = vmatpush1.msra.mxu0 %v397
  %433 = vmatprep.subr.mxu0 0.0
  %434 = vmatpush1.msra.mxu0 %v398
  %435 = vmatprep.subr.mxu0 0.0
  %436 = vmatpush1.msra.mxu0 %v399
  %437 = vmatprep.subr.mxu0 0.0
  %438 = vmatpush1.msra.mxu0 %v400
  %439 = vmatprep.subr.mxu0 0.0
  %440 = vmatpush1.msra.mxu0 %v401
  %441 = vmatprep.subr.mxu0 0.0
  %442 = vmatpush1.msra.mxu0 0.0
  %443 = vmatprep.subr.mxu0 0.0
  %444 = vmatpush1.msra.mxu0 0.0
  %445 = vmatprep.subr.mxu0 0.0
  %446 = vmatpush1.msra.mxu0 0.0
  %447 = vmatprep.subr.mxu0 0.0
  %448 = vmatpush1.msra.mxu0 0.0
  %449 = vmatprep.subr.mxu0 0.0
  %450 = vmatpush1.msra.mxu0 0.0
  %451 = vmatprep.subr.mxu0 0.0
  %452 = vmatpush1.msra.mxu0 0.0
  %453 = vmatprep.subr.mxu0 0.0
  %454 = vmatpush1.msra.mxu0 0.0
  %455 = vmatprep.subr.mxu0 0.0
  %456 = vmatpush1.msra.mxu0 0.0
  %457 = vmatprep.subr.mxu0 0.0
  %458 = vmatpush1.msra.mxu0 0.0
  %459 = vmatprep.subr.mxu0 0.0
  %460 = vmatpush1.msra.mxu0 0.0
  %461 = vmatprep.subr.mxu0 0.0
  %462 = vmatpush1.msra.mxu0 0.0
  %463 = vmatprep.subr.mxu0 0.0
  %464 = vmatpush1.msra.mxu0 0.0
  %465 = vmatprep.subr.mxu0 0.0
  %466 = vmatpush1.msra.mxu0 0.0
  %467 = vmatprep.subr.mxu0 0.0
  %468 = vmatpush1.msra.mxu0 0.0
  %469 = vmatprep.subr.mxu0 0.0
  %470 = vmatpush1.msra.mxu0 0.0
  %471 = vmatprep.subr.mxu0 0.0
  %472 = vmatpush1.msra.mxu0 0.0
  %473 = vmatprep.mubr.f32.mxu0 0.0
  %474 = vmatmul.mubr.f32.gmra.mrb[0].mxu0 %v371
  %v475 = vpop.f32.mrb[0].mxu0
  %v476 = vadd.f32 %v407, %v475
  %v477 = vpop.f32.mrb[0].mxu0
  %478 = vmatprep.mubr.f32.mxu0 0.0
  %479 = vmatmul.mubr.f32.gmra.mrb[0].mxu0 %v373
  %v480 = vpop.f32.mrb[0].mxu0
  %v481 = vadd.f32 %v407, %v480
  %v482 = vpop.f32.mrb[0].mxu0
  %483 = vmatprep.mubr.f32.mxu0 0.0
  %484 = vmatmul.mubr.f32.gmra.mrb[0].mxu0 %v375
  %v485 = vpop.f32.mrb[0].mxu0
  %v486 = vadd.f32 %v407, %v485
  %v487 = vpop.f32.mrb[0].mxu0
  %488 = vmatprep.mubr.f32.mxu0 0.0
  %489 = vmatmul.mubr.f32.gmra.mrb[0].mxu0 %v377
  %v490 = vpop.f32.mrb[0].mxu0
  %v491 = vadd.f32 %v407, %v490
  %v492 = vpop.f32.mrb[0].mxu0
  %493 = vmatprep.mubr.f32.mxu0 0.0
  %494 = vmatmul.mubr.f32.gmra.mrb[0].mxu0 %v379
  %v495 = vpop.f32.mrb[0].mxu0
  %v496 = vadd.f32 %v407, %v495
  %v497 = vpop.f32.mrb[0].mxu0
  %498 = vmatprep.mubr.f32.mxu0 0.0
  %499 = vmatmul.mubr.f32.gmra.mrb[0].mxu0 %v381
  %v500 = vpop.f32.mrb[0].mxu0
  %v501 = vadd.f32 %v407, %v500
  %v502 = vpop.f32.mrb[0].mxu0
  %503 = vmatprep.mubr.f32.mxu0 0.0
  %504 = vmatmul.mubr.f32.gmra.mrb[0].mxu0 %v383
  %v505 = vpop.f32.mrb[0].mxu0
  %v506 = vadd.f32 %v407, %v505
  %v507 = vpop.f32.mrb[0].mxu0
  %508 = vmatprep.mubr.f32.mxu0 0.0
  %509 = vmatmul.mubr.f32.gmra.mrb[0].mxu0 %v385
  %v510 = vpop.f32.mrb[0].mxu0
  %v511 = vadd.f32 %v407, %v510
  %v512 = vpop.f32.mrb[0].mxu0
  %513 = vdwg.mxu0
  %514 = vst [vmem:[%s7] sm:$0xff] %v476
  %515 = vst [vmem:[%s7 + $0x8] sm:$0xff] %v481
  %516 = vst [vmem:[%s7 + $0x10] sm:$0xff] %v486
  %517 = vst [vmem:[%s7 + $0x18] sm:$0xff] %v491
  %518 = vst [vmem:[%s7 + $0x20] sm:$0xff] %v496
  %519 = vst [vmem:[%s7 + $0x28] sm:$0xff] %v501
  %520 = vst [vmem:[%s7 + $0x30] sm:$0xff] %v506
  %521 = vst [vmem:[%s7 + $0x38] sm:$0xff] %v511
  // Predicated region
  $region30: #{autoencoder_rnn_forward.2} parent=0 // pred_check
    _
  $region31: #{autoencoder_rnn_forward.2} parent=0 // pred_check_branch
    %523 = sbr.rel (0) target = $region33
  $region32: #{autoencoder_rnn_forward.2} parent=0 // pred_region
    _
  $region33: #{autoencoder_rnn_forward.2} parent=0 // pred_fallthru
    _
  // Predicated region
  $region34: #{autoencoder_rnn_forward.2} parent=0 // pred_check
    _
  $region35: #{autoencoder_rnn_forward.2} parent=0 // pred_check_branch
    %525 = sbr.rel (0) target = $region37
  $region36: #{autoencoder_rnn_forward.2} parent=0 // pred_region
    _
  $region37: #{autoencoder_rnn_forward.2} parent=0 // pred_fallthru
    _

// kernel: autoencoder_rnn_forward.3
$region0: #{autoencoder_rnn_forward.3}
  #allocation0 [shape = 'u32[]', space=smem, size = 0x4, offset = 0x4, fixed_abs, tag = 'smem constant byte address 0x4 - core index']
  #allocation1 [shape = 'u32[144,128]{1,0:T(1,128)}', space=vmem, size = 0x12000, scoped, tag = 'internal scratch']
  #allocation2 [shape = 'f32[8,128]{1,0:T(8,128)}', space=vmem, size = 0x1000, scoped, tag = 'scratch operand']
  %s0 = inlined_call_operand.vmem [shape: f32[8,8,128], index: 0, kind: input, shape index: {}]
  %s1 = inlined_call_operand.vmem [shape: f32[128,128], index: 1, kind: input, shape index: {}]
  %s2 = inlined_call_operand.vmem [shape: f32[128,128], index: 2, kind: input, shape index: {}]
  %s3 = inlined_call_operand.vmem [shape: f32[1,128], index: 3, kind: input, shape index: {}]
  %s4 = inlined_call_operand.vmem [shape: f32[128,128], index: 4, kind: input, shape index: {}]
  %s5 = inlined_call_operand.vmem [shape: f32[1,128], index: 5, kind: input, shape index: {}]
  %s6 = inlined_call_operand.vmem [shape: f32[8,8,128], index: 6, kind: output, shape index: {0}]
  %s7 = inlined_call_operand.vmem [shape: f32[8,8,128], index: 7, kind: output, shape index: {1}]
  %8 = xla_tuple %s6, %s7
  %s9 = sld [smem:[#allocation0]]
  $region46: #{autoencoder_rnn_forward.3} parent=0
    _
  %s11 = ssub.s32 1, %s9
  %s12 = scalar_select 0, %s11, %s9
  // Predicated region
  $region2: #{autoencoder_rnn_forward.3} parent=0 // pred_check
    _
  $region3: #{autoencoder_rnn_forward.3} parent=0 // pred_check_branch
    %14 = sbr.rel (0) target = $region5
  $region4: #{autoencoder_rnn_forward.3} parent=0 // pred_region
    _
  $region5: #{autoencoder_rnn_forward.3} parent=0 // pred_fallthru
    _
  // Predicated region
  $region6: #{autoencoder_rnn_forward.3} parent=0 // pred_check
    _
  $region7: #{autoencoder_rnn_forward.3} parent=0 // pred_check_branch
    %16 = sbr.rel (0) target = $region9
  $region8: #{autoencoder_rnn_forward.3} parent=0 // pred_region
    _
  $region9: #{autoencoder_rnn_forward.3} parent=0 // pred_fallthru
    _
  // Predicated region
  $region10: #{autoencoder_rnn_forward.3} parent=0 // pred_check
    _
  $region11: #{autoencoder_rnn_forward.3} parent=0 // pred_check_branch
    %18 = sbr.rel (0) target = $region13
  $region12: #{autoencoder_rnn_forward.3} parent=0 // pred_region
    _
  $region13: #{autoencoder_rnn_forward.3} parent=0 // pred_fallthru
    _
  // Predicated region
  $region14: #{autoencoder_rnn_forward.3} parent=0 // pred_check
    _
  $region15: #{autoencoder_rnn_forward.3} parent=0 // pred_check_branch
    %20 = sbr.rel (0) target = $region17
  $region16: #{autoencoder_rnn_forward.3} parent=0 // pred_region
    _
  $region17: #{autoencoder_rnn_forward.3} parent=0 // pred_fallthru
    _
  // Predicated region
  $region18: #{autoencoder_rnn_forward.3} parent=0 // pred_check
    _
  $region19: #{autoencoder_rnn_forward.3} parent=0 // pred_check_branch
    %22 = sbr.rel (0) target = $region21
  $region20: #{autoencoder_rnn_forward.3} parent=0 // pred_region
    _
  $region21: #{autoencoder_rnn_forward.3} parent=0 // pred_fallthru
    _
  // Predicated region
  $region22: #{autoencoder_rnn_forward.3} parent=0 // pred_check
    _
  $region23: #{autoencoder_rnn_forward.3} parent=0 // pred_check_branch
    %24 = sbr.rel (0) target = $region25
  $region24: #{autoencoder_rnn_forward.3} parent=0 // pred_region
    _
  $region25: #{autoencoder_rnn_forward.3} parent=0 // pred_fallthru
    _
  %p25 = scmp.eq.s32.totalorder 0, 0
  // Predicated region
  $region26: #{autoencoder_rnn_forward.3} parent=0 // pred_check
    %p26 = pneg %p25
  $region27: #{autoencoder_rnn_forward.3} parent=0 // pred_check_branch
    %28 = sbr.rel (%p26) target = $region29
  $region28: #{autoencoder_rnn_forward.3} parent=0 // pred_region
    %29 = vst [vmem:[#allocation2] sm:$0xff] 0.0
  $region29: #{autoencoder_rnn_forward.3} parent=0 // pred_fallthru
    _
  %v30 = vld [vmem:[#allocation2] sm:$0xff]
  %v31 = vld [vmem:[%s0] sm:$0xff]
  %v32 = vld [vmem:[%s1] sm:$0xff]
  %v33 = vld [vmem:[%s1 + $0x8] sm:$0xff]
  %v34 = vld [vmem:[%s1 + $0x10] sm:$0xff]
  %v35 = vld [vmem:[%s1 + $0x18] sm:$0xff]
  %v36 = vld [vmem:[%s1 + $0x20] sm:$0xff]
  %v37 = vld [vmem:[%s1 + $0x28] sm:$0xff]
  %v38 = vld [vmem:[%s1 + $0x30] sm:$0xff]
  %v39 = vld [vmem:[%s1 + $0x38] sm:$0xff]
  %v40 = vld [vmem:[%s1 + $0x40] sm:$0xff]
  %v41 = vld [vmem:[%s1 + $0x48] sm:$0xff]
  %v42 = vld [vmem:[%s1 + $0x50] sm:$0xff]
  %v43 = vld [vmem:[%s1 + $0x58] sm:$0xff]
  %v44 = vld [vmem:[%s1 + $0x60] sm:$0xff]
  %v45 = vld [vmem:[%s1 + $0x68] sm:$0xff]
  %v46 = vld [vmem:[%s1 + $0x70] sm:$0xff]
  %v47 = vld [vmem:[%s1 + $0x78] sm:$0xff]
  %48 = vmatprep.subr.mxu0 0.0
  %49 = vmatpush1.msra.mxu0 %v32
  %50 = vmatprep.subr.mxu0 0.0
  %51 = vmatpush1.msra.mxu0 %v33
  %52 = vmatprep.subr.mxu0 0.0
  %53 = vmatpush1.msra.mxu0 %v34
  %54 = vmatprep.subr.mxu0 0.0
  %55 = vmatpush1.msra.mxu0 %v35
  %56 = vmatprep.subr.mxu0 0.0
  %57 = vmatpush1.msra.mxu0 %v36
  %58 = vmatprep.subr.mxu0 0.0
  %59 = vmatpush1.msra.mxu0 %v37
  %60 = vmatprep.subr.mxu0 0.0
  %61 = vmatpush1.msra.mxu0 %v38
  %62 = vmatprep.subr.mxu0 0.0
  %63 = vmatpush1.msra.mxu0 %v39
  %64 = vmatprep.subr.mxu0 0.0
  %65 = vmatpush1.msra.mxu0 %v40
  %66 = vmatprep.subr.mxu0 0.0
  %67 = vmatpush1.msra.mxu0 %v41
  %68 = vmatprep.subr.mxu0 0.0
  %69 = vmatpush1.msra.mxu0 %v42
  %70 = vmatprep.subr.mxu0 0.0
  %71 = vmatpush1.msra.mxu0 %v43
  %72 = vmatprep.subr.mxu0 0.0
  %73 = vmatpush1.msra.mxu0 %v44
  %74 = vmatprep.subr.mxu0 0.0
  %75 = vmatpush1.msra.mxu0 %v45
  %76 = vmatprep.subr.mxu0 0.0
  %77 = vmatpush1.msra.mxu0 %v46
  %78 = vmatprep.subr.mxu0 0.0
  %79 = vmatpush1.msra.mxu0 %v47
  %80 = vmatprep.subr.mxu0 0.0
  %81 = vmatpush1.msra.mxu0 0.0
  %82 = vmatprep.subr.mxu0 0.0
  %83 = vmatpush1.msra.mxu0 0.0
  %84 = vmatprep.subr.mxu0 0.0
  %85 = vmatpush1.msra.mxu0 0.0
  %86 = vmatprep.subr.mxu0 0.0
  %87 = vmatpush1.msra.mxu0 0.0
  %88 = vmatprep.subr.mxu0 0.0
  %89 = vmatpush1.msra.mxu0 0.0
  %90 = vmatprep.subr.mxu0 0.0
  %91 = vmatpush1.msra.mxu0 0.0
  %92 = vmatprep.subr.mxu0 0.0
  %93 = vmatpush1.msra.mxu0 0.0
  %94 = vmatprep.subr.mxu0 0.0
  %95 = vmatpush1.msra.mxu0 0.0
  %96 = vmatprep.subr.mxu0 0.0
  %97 = vmatpush1.msra.mxu0 0.0
  %98 = vmatprep.subr.mxu0 0.0
  %99 = vmatpush1.msra.mxu0 0.0
  %100 = vmatprep.subr.mxu0 0.0
  %101 = vmatpush1.msra.mxu0 0.0
  %102 = vmatprep.subr.mxu0 0.0
  %103 = vmatpush1.msra.mxu0 0.0
  %104 = vmatprep.subr.mxu0 0.0
  %105 = vmatpush1.msra.mxu0 0.0
  %106 = vmatprep.subr.mxu0 0.0
  %107 = vmatpush1.msra.mxu0 0.0
  %108 = vmatprep.subr.mxu0 0.0
  %109 = vmatpush1.msra.mxu0 0.0
  %110 = vmatprep.subr.mxu0 0.0
  %111 = vmatpush1.msra.mxu0 0.0
  %112 = vmatprep.mubr.f32.mxu0 0.0
  %113 = vmatmul.mubr.f32.gmra.mrb[0].mxu0 %v30
  %v114 = vpop.f32.mrb[0].mxu0
  %v115 = vadd.f32 0.0, %v114
  %v116 = vpop.f32.mrb[0].mxu0
  %117 = vdwg.mxu0
  %v118 = vadd.f32 %v31, %v115
  %v119 = vtanh.pop %v118
  %120 = vst [vmem:[%s6] sm:$0xff] %v119
  %s121 = scalar_lea.vmem %s0, 8
  %v122 = vld [vmem:[%s121] sm:$0xff]
  %v123 = vld [vmem:[%s1] sm:$0xff]
  %v124 = vld [vmem:[%s1 + $0x8] sm:$0xff]
  %v125 = vld [vmem:[%s1 + $0x10] sm:$0xff]
  %v126 = vld [vmem:[%s1 + $0x18] sm:$0xff]
  %v127 = vld [vmem:[%s1 + $0x20] sm:$0xff]
  %v128 = vld [vmem:[%s1 + $0x28] sm:$0xff]
  %v129 = vld [vmem:[%s1 + $0x30] sm:$0xff]
  %v130 = vld [vmem:[%s1 + $0x38] sm:$0xff]
  %v131 = vld [vmem:[%s1 + $0x40] sm:$0xff]
  %v132 = vld [vmem:[%s1 + $0x48] sm:$0xff]
  %v133 = vld [vmem:[%s1 + $0x50] sm:$0xff]
  %v134 = vld [vmem:[%s1 + $0x58] sm:$0xff]
  %v135 = vld [vmem:[%s1 + $0x60] sm:$0xff]
  %v136 = vld [vmem:[%s1 + $0x68] sm:$0xff]
  %v137 = vld [vmem:[%s1 + $0x70] sm:$0xff]
  %v138 = vld [vmem:[%s1 + $0x78] sm:$0xff]
  %139 = vmatprep.subr.mxu0 0.0
  %140 = vmatpush1.msra.mxu0 %v123
  %141 = vmatprep.subr.mxu0 0.0
  %142 = vmatpush1.msra.mxu0 %v124
  %143 = vmatprep.subr.mxu0 0.0
  %144 = vmatpush1.msra.mxu0 %v125
  %145 = vmatprep.subr.mxu0 0.0
  %146 = vmatpush1.msra.mxu0 %v126
  %147 = vmatprep.subr.mxu0 0.0
  %148 = vmatpush1.msra.mxu0 %v127
  %149 = vmatprep.subr.mxu0 0.0
  %150 = vmatpush1.msra.mxu0 %v128
  %151 = vmatprep.subr.mxu0 0.0
  %152 = vmatpush1.msra.mxu0 %v129
  %153 = vmatprep.subr.mxu0 0.0
  %154 = vmatpush1.msra.mxu0 %v130
  %155 = vmatprep.subr.mxu0 0.0
  %156 = vmatpush1.msra.mxu0 %v131
  %157 = vmatprep.subr.mxu0 0.0
  %158 = vmatpush1.msra.mxu0 %v132
  %159 = vmatprep.subr.mxu0 0.0
  %160 = vmatpush1.msra.mxu0 %v133
  %161 = vmatprep.subr.mxu0 0.0
  %162 = vmatpush1.msra.mxu0 %v134
  %163 = vmatprep.subr.mxu0 0.0
  %164 = vmatpush1.msra.mxu0 %v135
  %165 = vmatprep.subr.mxu0 0.0
  %166 = vmatpush1.msra.mxu0 %v136
  %167 = vmatprep.subr.mxu0 0.0
  %168 = vmatpush1.msra.mxu0 %v137
  %169 = vmatprep.subr.mxu0 0.0
  %170 = vmatpush1.msra.mxu0 %v138
  %171 = vmatprep.subr.mxu0 0.0
  %172 = vmatpush1.msra.mxu0 0.0
  %173 = vmatprep.subr.mxu0 0.0
  %174 = vmatpush1.msra.mxu0 0.0
  %175 = vmatprep.subr.mxu0 0.0
  %176 = vmatpush1.msra.mxu0 0.0
  %177 = vmatprep.subr.mxu0 0.0
  %178 = vmatpush1.msra.mxu0 0.0
  %179 = vmatprep.subr.mxu0 0.0
  %180 = vmatpush1.msra.mxu0 0.0
  %181 = vmatprep.subr.mxu0 0.0
  %182 = vmatpush1.msra.mxu0 0.0
  %183 = vmatprep.subr.mxu0 0.0
  %184 = vmatpush1.msra.mxu0 0.0
  %185 = vmatprep.subr.mxu0 0.0
  %186 = vmatpush1.msra.mxu0 0.0
  %187 = vmatprep.subr.mxu0 0.0
  %188 = vmatpush1.msra.mxu0 0.0
  %189 = vmatprep.subr.mxu0 0.0
  %190 = vmatpush1.msra.mxu0 0.0
  %191 = vmatprep.subr.mxu0 0.0
  %192 = vmatpush1.msra.mxu0 0.0
  %193 = vmatprep.subr.mxu0 0.0
  %194 = vmatpush1.msra.mxu0 0.0
  %195 = vmatprep.subr.mxu0 0.0
  %196 = vmatpush1.msra.mxu0 0.0
  %197 = vmatprep.subr.mxu0 0.0
  %198 = vmatpush1.msra.mxu0 0.0
  %199 = vmatprep.subr.mxu0 0.0
  %200 = vmatpush1.msra.mxu0 0.0
  %201 = vmatprep.subr.mxu0 0.0
  %202 = vmatpush1.msra.mxu0 0.0
  %203 = vmatprep.mubr.f32.mxu0 0.0
  %204 = vmatmul.mubr.f32.gmra.mrb[0].mxu0 %v119
  %v205 = vpop.f32.mrb[0].mxu0
  %v206 = vadd.f32 0.0, %v205
  %v207 = vpop.f32.mrb[0].mxu0
  %208 = vdwg.mxu0
  %v209 = vadd.f32 %v122, %v206
  %v210 = vtanh.pop %v209
  %s211 = scalar_lea.vmem %s6, 8
  %212 = vst [vmem:[%s211] sm:$0xff] %v210
  %s213 = scalar_lea.vmem %s0, 16
  %v214 = vld [vmem:[%s213] sm:$0xff]
  %v215 = vld [vmem:[%s1] sm:$0xff]
  %v216 = vld [vmem:[%s1 + $0x8] sm:$0xff]
  %v217 = vld [vmem:[%s1 + $0x10] sm:$0xff]
  %v218 = vld [vmem:[%s1 + $0x18] sm:$0xff]
  %v219 = vld [vmem:[%s1 + $0x20] sm:$0xff]
  %v220 = vld [vmem:[%s1 + $0x28] sm:$0xff]
  %v221 = vld [vmem:[%s1 + $0x30] sm:$0xff]
  %v222 = vld [vmem:[%s1 + $0x38] sm:$0xff]
  %v223 = vld [vmem:[%s1 + $0x40] sm:$0xff]
  %v224 = vld [vmem:[%s1 + $0x48] sm:$0xff]
  %v225 = vld [vmem:[%s1 + $0x50] sm:$0xff]
  %v226 = vld [vmem:[%s1 + $0x58] sm:$0xff]
  %v227 = vld [vmem:[%s1 + $0x60] sm:$0xff]
  %v228 = vld [vmem:[%s1 + $0x68] sm:$0xff]
  %v229 = vld [vmem:[%s1 + $0x70] sm:$0xff]
  %v230 = vld [vmem:[%s1 + $0x78] sm:$0xff]
  %231 = vmatprep.subr.mxu0 0.0
  %232 = vmatpush1.msra.mxu0 %v215
  %233 = vmatprep.subr.mxu0 0.0
  %234 = vmatpush1.msra.mxu0 %v216
  %235 = vmatprep.subr.mxu0 0.0
  %236 = vmatpush1.msra.mxu0 %v217
  %237 = vmatprep.subr.mxu0 0.0
  %238 = vmatpush1.msra.mxu0 %v218
  %239 = vmatprep.subr.mxu0 0.0
  %240 = vmatpush1.msra.mxu0 %v219
  %241 = vmatprep.subr.mxu0 0.0
  %242 = vmatpush1.msra.mxu0 %v220
  %243 = vmatprep.subr.mxu0 0.0
  %244 = vmatpush1.msra.mxu0 %v221
  %245 = vmatprep.subr.mxu0 0.0
  %246 = vmatpush1.msra.mxu0 %v222
  %247 = vmatprep.subr.mxu0 0.0
  %248 = vmatpush1.msra.mxu0 %v223
  %249 = vmatprep.subr.mxu0 0.0
  %250 = vmatpush1.msra.mxu0 %v224
  %251 = vmatprep.subr.mxu0 0.0
  %252 = vmatpush1.msra.mxu0 %v225
  %253 = vmatprep.subr.mxu0 0.0
  %254 = vmatpush1.msra.mxu0 %v226
  %255 = vmatprep.subr.mxu0 0.0
  %256 = vmatpush1.msra.mxu0 %v227
  %257 = vmatprep.subr.mxu0 0.0
  %258 = vmatpush1.msra.mxu0 %v228
  %259 = vmatprep.subr.mxu0 0.0
  %260 = vmatpush1.msra.mxu0 %v229
  %261 = vmatprep.subr.mxu0 0.0
  %262 = vmatpush1.msra.mxu0 %v230
  %263 = vmatprep.subr.mxu0 0.0
  %264 = vmatpush1.msra.mxu0 0.0
  %265 = vmatprep.subr.mxu0 0.0
  %266 = vmatpush1.msra.mxu0 0.0
  %267 = vmatprep.subr.mxu0 0.0
  %268 = vmatpush1.msra.mxu0 0.0
  %269 = vmatprep.subr.mxu0 0.0
  %270 = vmatpush1.msra.mxu0 0.0
  %271 = vmatprep.subr.mxu0 0.0
  %272 = vmatpush1.msra.mxu0 0.0
  %273 = vmatprep.subr.mxu0 0.0
  %274 = vmatpush1.msra.mxu0 0.0
  %275 = vmatprep.subr.mxu0 0.0
  %276 = vmatpush1.msra.mxu0 0.0
  %277 = vmatprep.subr.mxu0 0.0
  %278 = vmatpush1.msra.mxu0 0.0
  %279 = vmatprep.subr.mxu0 0.0
  %280 = vmatpush1.msra.mxu0 0.0
  %281 = vmatprep.subr.mxu0 0.0
  %282 = vmatpush1.msra.mxu0 0.0
  %283 = vmatprep.subr.mxu0 0.0
  %284 = vmatpush1.msra.mxu0 0.0
  %285 = vmatprep.subr.mxu0 0.0
  %286 = vmatpush1.msra.mxu0 0.0
  %287 = vmatprep.subr.mxu0 0.0
  %288 = vmatpush1.msra.mxu0 0.0
  %289 = vmatprep.subr.mxu0 0.0
  %290 = vmatpush1.msra.mxu0 0.0
  %291 = vmatprep.subr.mxu0 0.0
  %292 = vmatpush1.msra.mxu0 0.0
  %293 = vmatprep.subr.mxu0 0.0
  %294 = vmatpush1.msra.mxu0 0.0
  %295 = vmatprep.mubr.f32.mxu0 0.0
  %296 = vmatmul.mubr.f32.gmra.mrb[0].mxu0 %v210
  %v297 = vpop.f32.mrb[0].mxu0
  %v298 = vadd.f32 0.0, %v297
  %v299 = vpop.f32.mrb[0].mxu0
  %300 = vdwg.mxu0
  %v301 = vadd.f32 %v214, %v298
  %v302 = vtanh.pop %v301
  %s303 = scalar_lea.vmem %s6, 16
  %304 = vst [vmem:[%s303] sm:$0xff] %v302
  %s305 = scalar_lea.vmem %s0, 24
  %v306 = vld [vmem:[%s305] sm:$0xff]
  %v307 = vld [vmem:[%s1] sm:$0xff]
  %v308 = vld [vmem:[%s1 + $0x8] sm:$0xff]
  %v309 = vld [vmem:[%s1 + $0x10] sm:$0xff]
  %v310 = vld [vmem:[%s1 + $0x18] sm:$0xff]
  %v311 = vld [vmem:[%s1 + $0x20] sm:$0xff]
  %v312 = vld [vmem:[%s1 + $0x28] sm:$0xff]
  %v313 = vld [vmem:[%s1 + $0x30] sm:$0xff]
  %v314 = vld [vmem:[%s1 + $0x38] sm:$0xff]
  %v315 = vld [vmem:[%s1 + $0x40] sm:$0xff]
  %v316 = vld [vmem:[%s1 + $0x48] sm:$0xff]
  %v317 = vld [vmem:[%s1 + $0x50] sm:$0xff]
  %v318 = vld [vmem:[%s1 + $0x58] sm:$0xff]
  %v319 = vld [vmem:[%s1 + $0x60] sm:$0xff]
  %v320 = vld [vmem:[%s1 + $0x68] sm:$0xff]
  %v321 = vld [vmem:[%s1 + $0x70] sm:$0xff]
  %v322 = vld [vmem:[%s1 + $0x78] sm:$0xff]
  %323 = vmatprep.subr.mxu0 0.0
  %324 = vmatpush1.msra.mxu0 %v307
  %325 = vmatprep.subr.mxu0 0.0
  %326 = vmatpush1.msra.mxu0 %v308
  %327 = vmatprep.subr.mxu0 0.0
  %328 = vmatpush1.msra.mxu0 %v309
  %329 = vmatprep.subr.mxu0 0.0
  %330 = vmatpush1.msra.mxu0 %v310
  %331 = vmatprep.subr.mxu0 0.0
  %332 = vmatpush1.msra.mxu0 %v311
  %333 = vmatprep.subr.mxu0 0.0
  %334 = vmatpush1.msra.mxu0 %v312
  %335 = vmatprep.subr.mxu0 0.0
  %336 = vmatpush1.msra.mxu0 %v313
  %337 = vmatprep.subr.mxu0 0.0
  %338 = vmatpush1.msra.mxu0 %v314
  %339 = vmatprep.subr.mxu0 0.0
  %340 = vmatpush1.msra.mxu0 %v315
  %341 = vmatprep.subr.mxu0 0.0
  %342 = vmatpush1.msra.mxu0 %v316
  %343 = vmatprep.subr.mxu0 0.0
  %344 = vmatpush1.msra.mxu0 %v317
  %345 = vmatprep.subr.mxu0 0.0
  %346 = vmatpush1.msra.mxu0 %v318
  %347 = vmatprep.subr.mxu0 0.0
  %348 = vmatpush1.msra.mxu0 %v319
  %349 = vmatprep.subr.mxu0 0.0
  %350 = vmatpush1.msra.mxu0 %v320
  %351 = vmatprep.subr.mxu0 0.0
  %352 = vmatpush1.msra.mxu0 %v321
  %353 = vmatprep.subr.mxu0 0.0
  %354 = vmatpush1.msra.mxu0 %v322
  %355 = vmatprep.subr.mxu0 0.0
  %356 = vmatpush1.msra.mxu0 0.0
  %357 = vmatprep.subr.mxu0 0.0
  %358 = vmatpush1.msra.mxu0 0.0
  %359 = vmatprep.subr.mxu0 0.0
  %360 = vmatpush1.msra.mxu0 0.0
  %361 = vmatprep.subr.mxu0 0.0
  %362 = vmatpush1.msra.mxu0 0.0
  %363 = vmatprep.subr.mxu0 0.0
  %364 = vmatpush1.msra.mxu0 0.0
  %365 = vmatprep.subr.mxu0 0.0
  %366 = vmatpush1.msra.mxu0 0.0
  %367 = vmatprep.subr.mxu0 0.0
  %368 = vmatpush1.msra.mxu0 0.0
  %369 = vmatprep.subr.mxu0 0.0
  %370 = vmatpush1.msra.mxu0 0.0
  %371 = vmatprep.subr.mxu0 0.0
  %372 = vmatpush1.msra.mxu0 0.0
  %373 = vmatprep.subr.mxu0 0.0
  %374 = vmatpush1.msra.mxu0 0.0
  %375 = vmatprep.subr.mxu0 0.0
  %376 = vmatpush1.msra.mxu0 0.0
  %377 = vmatprep.subr.mxu0 0.0
  %378 = vmatpush1.msra.mxu0 0.0
  %379 = vmatprep.subr.mxu0 0.0
  %380 = vmatpush1.msra.mxu0 0.0
  %381 = vmatprep.subr.mxu0 0.0
  %382 = vmatpush1.msra.mxu0 0.0
  %383 = vmatprep.subr.mxu0 0.0
  %384 = vmatpush1.msra.mxu0 0.0
  %385 = vmatprep.subr.mxu0 0.0
  %386 = vmatpush1.msra.mxu0 0.0
  %387 = vmatprep.mubr.f32.mxu0 0.0
  %388 = vmatmul.mubr.f32.gmra.mrb[0].mxu0 %v302
  %v389 = vpop.f32.mrb[0].mxu0
  %v390 = vadd.f32 0.0, %v389
  %v391 = vpop.f32.mrb[0].mxu0
  %392 = vdwg.mxu0
  %v393 = vadd.f32 %v306, %v390
  %v394 = vtanh.pop %v393
  %s395 = scalar_lea.vmem %s6, 24
  %396 = vst [vmem:[%s395] sm:$0xff] %v394
  %s397 = scalar_lea.vmem %s0, 32
  %v398 = vld [vmem:[%s397] sm:$0xff]
  %v399 = vld [vmem:[%s1] sm:$0xff]
  %v400 = vld [vmem:[%s1 + $0x8] sm:$0xff]
  %v401 = vld [vmem:[%s1 + $0x10] sm:$0xff]
  %v402 = vld [vmem:[%s1 + $0x18] sm:$0xff]
  %v403 = vld [vmem:[%s1 + $0x20] sm:$0xff]
  %v404 = vld [vmem:[%s1 + $0x28] sm:$0xff]
  %v405 = vld [vmem:[%s1 + $0x30] sm:$0xff]
  %v406 = vld [vmem:[%s1 + $0x38] sm:$0xff]
  %v407 = vld [vmem:[%s1 + $0x40] sm:$0xff]
  %v408 = vld [vmem:[%s1 + $0x48] sm:$0xff]
  %v409 = vld [vmem:[%s1 + $0x50] sm:$0xff]
  %v410 = vld [vmem:[%s1 + $0x58] sm:$0xff]
  %v411 = vld [vmem:[%s1 + $0x60] sm:$0xff]
  %v412 = vld [vmem:[%s1 + $0x68] sm:$0xff]
  %v413 = vld [vmem:[%s1 + $0x70] sm:$0xff]
  %v414 = vld [vmem:[%s1 + $0x78] sm:$0xff]
  %415 = vmatprep.subr.mxu0 0.0
  %416 = vmatpush1.msra.mxu0 %v399
  %417 = vmatprep.subr.mxu0 0.0
  %418 = vmatpush1.msra.mxu0 %v400
  %419 = vmatprep.subr.mxu0 0.0
  %420 = vmatpush1.msra.mxu0 %v401
  %421 = vmatprep.subr.mxu0 0.0
  %422 = vmatpush1.msra.mxu0 %v402
  %423 = vmatprep.subr.mxu0 0.0
  %424 = vmatpush1.msra.mxu0 %v403
  %425 = vmatprep.subr.mxu0 0.0
  %426 = vmatpush1.msra.mxu0 %v404
  %427 = vmatprep.subr.mxu0 0.0
  %428 = vmatpush1.msra.mxu0 %v405
  %429 = vmatprep.subr.mxu0 0.0
  %430 = vmatpush1.msra.mxu0 %v406
  %431 = vmatprep.subr.mxu0 0.0
  %432 = vmatpush1.msra.mxu0 %v407
  %433 = vmatprep.subr.mxu0 0.0
  %434 = vmatpush1.msra.mxu0 %v408
  %435 = vmatprep.subr.mxu0 0.0
  %436 = vmatpush1.msra.mxu0 %v409
  %437 = vmatprep.subr.mxu0 0.0
  %438 = vmatpush1.msra.mxu0 %v410
  %439 = vmatprep.subr.mxu0 0.0
  %440 = vmatpush1.msra.mxu0 %v411
  %441 = vmatprep.subr.mxu0 0.0
  %442 = vmatpush1.msra.mxu0 %v412
  %443 = vmatprep.subr.mxu0 0.0
  %444 = vmatpush1.msra.mxu0 %v413
  %445 = vmatprep.subr.mxu0 0.0
  %446 = vmatpush1.msra.mxu0 %v414
  %447 = vmatprep.subr.mxu0 0.0
  %448 = vmatpush1.msra.mxu0 0.0
  %449 = vmatprep.subr.mxu0 0.0
  %450 = vmatpush1.msra.mxu0 0.0
  %451 = vmatprep.subr.mxu0 0.0
  %452 = vmatpush1.msra.mxu0 0.0
  %453 = vmatprep.subr.mxu0 0.0
  %454 = vmatpush1.msra.mxu0 0.0
  %455 = vmatprep.subr.mxu0 0.0
  %456 = vmatpush1.msra.mxu0 0.0
  %457 = vmatprep.subr.mxu0 0.0
  %458 = vmatpush1.msra.mxu0 0.0
  %459 = vmatprep.subr.mxu0 0.0
  %460 = vmatpush1.msra.mxu0 0.0
  %461 = vmatprep.subr.mxu0 0.0
  %462 = vmatpush1.msra.mxu0 0.0
  %463 = vmatprep.subr.mxu0 0.0
  %464 = vmatpush1.msra.mxu0 0.0
  %465 = vmatprep.subr.mxu0 0.0
  %466 = vmatpush1.msra.mxu0 0.0
  %467 = vmatprep.subr.mxu0 0.0
  %468 = vmatpush1.msra.mxu0 0.0
  %469 = vmatprep.subr.mxu0 0.0
  %470 = vmatpush1.msra.mxu0 0.0
  %471 = vmatprep.subr.mxu0 0.0
  %472 = vmatpush1.msra.mxu0 0.0
  %473 = vmatprep.subr.mxu0 0.0
  %474 = vmatpush1.msra.mxu0 0.0
  %475 = vmatprep.subr.mxu0 0.0
  %476 = vmatpush1.msra.mxu0 0.0
  %477 = vmatprep.subr.mxu0 0.0
  %478 = vmatpush1.msra.mxu0 0.0
  %479 = vmatprep.mubr.f32.mxu0 0.0
  %480 = vmatmul.mubr.f32.gmra.mrb[0].mxu0 %v394
  %v481 = vpop.f32.mrb[0].mxu0
  %v482 = vadd.f32 0.0, %v481
  %v483 = vpop.f32.mrb[0].mxu0
  %484 = vdwg.mxu0
  %v485 = vadd.f32 %v398, %v482
  %v486 = vtanh.pop %v485
  %s487 = scalar_lea.vmem %s6, 32
  %488 = vst [vmem:[%s487] sm:$0xff] %v486
  %s489 = scalar_lea.vmem %s0, 40
  %v490 = vld [vmem:[%s489] sm:$0xff]
  %v491 = vld [vmem:[%s1] sm:$0xff]
  %v492 = vld [vmem:[%s1 + $0x8] sm:$0xff]
  %v493 = vld [vmem:[%s1 + $0x10] sm:$0xff]
  %v494 = vld [vmem:[%s1 + $0x18] sm:$0xff]
  %v495 = vld [vmem:[%s1 + $0x20] sm:$0xff]
  %v496 = vld [vmem:[%s1 + $0x28] sm:$0xff]
  %v497 = vld [vmem:[%s1 + $0x30] sm:$0xff]
  %v498 = vld [vmem:[%s1 + $0x38] sm:$0xff]
  %v499 = vld [vmem:[%s1 + $0x40] sm:$0xff]
  %v500 = vld [vmem:[%s1 + $0x48] sm:$0xff]
  %v501 = vld [vmem:[%s1 + $0x50] sm:$0xff]
  %v502 = vld [vmem:[%s1 + $0x58] sm:$0xff]
  %v503 = vld [vmem:[%s1 + $0x60] sm:$0xff]
  %v504 = vld [vmem:[%s1 + $0x68] sm:$0xff]
  %v505 = vld [vmem:[%s1 + $0x70] sm:$0xff]
  %v506 = vld [vmem:[%s1 + $0x78] sm:$0xff]
  %507 = vmatprep.subr.mxu0 0.0
  %508 = vmatpush1.msra.mxu0 %v491
  %509 = vmatprep.subr.mxu0 0.0
  %510 = vmatpush1.msra.mxu0 %v492
  %511 = vmatprep.subr.mxu0 0.0
  %512 = vmatpush1.msra.mxu0 %v493
  %513 = vmatprep.subr.mxu0 0.0
  %514 = vmatpush1.msra.mxu0 %v494
  %515 = vmatprep.subr.mxu0 0.0
  %516 = vmatpush1.msra.mxu0 %v495
  %517 = vmatprep.subr.mxu0 0.0
  %518 = vmatpush1.msra.mxu0 %v496
  %519 = vmatprep.subr.mxu0 0.0
  %520 = vmatpush1.msra.mxu0 %v497
  %521 = vmatprep.subr.mxu0 0.0
  %522 = vmatpush1.msra.mxu0 %v498
  %523 = vmatprep.subr.mxu0 0.0
  %524 = vmatpush1.msra.mxu0 %v499
  %525 = vmatprep.subr.mxu0 0.0
  %526 = vmatpush1.msra.mxu0 %v500
  %527 = vmatprep.subr.mxu0 0.0
  %528 = vmatpush1.msra.mxu0 %v501
  %529 = vmatprep.subr.mxu0 0.0
  %530 = vmatpush1.msra.mxu0 %v502
  %531 = vmatprep.subr.mxu0 0.0
  %532 = vmatpush1.msra.mxu0 %v503
  %533 = vmatprep.subr.mxu0 0.0
  %534 = vmatpush1.msra.mxu0 %v504
  %535 = vmatprep.subr.mxu0 0.0
  %536 = vmatpush1.msra.mxu0 %v505
  %537 = vmatprep.subr.mxu0 0.0
  %538 = vmatpush1.msra.mxu0 %v506
  %539 = vmatprep.subr.mxu0 0.0
  %540 = vmatpush1.msra.mxu0 0.0
  %541 = vmatprep.subr.mxu0 0.0
  %542 = vmatpush1.msra.mxu0 0.0
  %543 = vmatprep.subr.mxu0 0.0
  %544 = vmatpush1.msra.mxu0 0.0
  %545 = vmatprep.subr.mxu0 0.0
  %546 = vmatpush1.msra.mxu0 0.0
  %547 = vmatprep.subr.mxu0 0.0
  %548 = vmatpush1.msra.mxu0 0.0
  %549 = vmatprep.subr.mxu0 0.0
  %550 = vmatpush1.msra.mxu0 0.0
  %551 = vmatprep.subr.mxu0 0.0
  %552 = vmatpush1.msra.mxu0 0.0
  %553 = vmatprep.subr.mxu0 0.0
  %554 = vmatpush1.msra.mxu0 0.0
  %555 = vmatprep.subr.mxu0 0.0
  %556 = vmatpush1.msra.mxu0 0.0
  %557 = vmatprep.subr.mxu0 0.0
  %558 = vmatpush1.msra.mxu0 0.0
  %559 = vmatprep.subr.mxu0 0.0
  %560 = vmatpush1.msra.mxu0 0.0
  %561 = vmatprep.subr.mxu0 0.0
  %562 = vmatpush1.msra.mxu0 0.0
  %563 = vmatprep.subr.mxu0 0.0
  %564 = vmatpush1.msra.mxu0 0.0
  %565 = vmatprep.subr.mxu0 0.0
  %566 = vmatpush1.msra.mxu0 0.0
  %567 = vmatprep.subr.mxu0 0.0
  %568 = vmatpush1.msra.mxu0 0.0
  %569 = vmatprep.subr.mxu0 0.0
  %570 = vmatpush1.msra.mxu0 0.0
  %571 = vmatprep.mubr.f32.mxu0 0.0
  %572 = vmatmul.mubr.f32.gmra.mrb[0].mxu0 %v486
  %v573 = vpop.f32.mrb[0].mxu0
  %v574 = vadd.f32 0.0, %v573
  %v575 = vpop.f32.mrb[0].mxu0
  %576 = vdwg.mxu0
  %v577 = vadd.f32 %v490, %v574
  %v578 = vtanh.pop %v577
  %s579 = scalar_lea.vmem %s6, 40
  %580 = vst [vmem:[%s579] sm:$0xff] %v578
  %s581 = scalar_lea.vmem %s0, 48
  %v582 = vld [vmem:[%s581] sm:$0xff]
  %v583 = vld [vmem:[%s1] sm:$0xff]
  %v584 = vld [vmem:[%s1 + $0x8] sm:$0xff]
  %v585 = vld [vmem:[%s1 + $0x10] sm:$0xff]
  %v586 = vld [vmem:[%s1 + $0x18] sm:$0xff]
  %v587 = vld [vmem:[%s1 + $0x20] sm:$0xff]
  %v588 = vld [vmem:[%s1 + $0x28] sm:$0xff]
  %v589 = vld [vmem:[%s1 + $0x30] sm:$0xff]
  %v590 = vld [vmem:[%s1 + $0x38] sm:$0xff]
  %v591 = vld [vmem:[%s1 + $0x40] sm:$0xff]
  %v592 = vld [vmem:[%s1 + $0x48] sm:$0xff]
  %v593 = vld [vmem:[%s1 + $0x50] sm:$0xff]
  %v594 = vld [vmem:[%s1 + $0x58] sm:$0xff]
  %v595 = vld [vmem:[%s1 + $0x60] sm:$0xff]
  %v596 = vld [vmem:[%s1 + $0x68] sm:$0xff]
  %v597 = vld [vmem:[%s1 + $0x70] sm:$0xff]
  %v598 = vld [vmem:[%s1 + $0x78] sm:$0xff]
  %599 = vmatprep.subr.mxu0 0.0
  %600 = vmatpush1.msra.mxu0 %v583
  %601 = vmatprep.subr.mxu0 0.0
  %602 = vmatpush1.msra.mxu0 %v584
  %603 = vmatprep.subr.mxu0 0.0
  %604 = vmatpush1.msra.mxu0 %v585
  %605 = vmatprep.subr.mxu0 0.0
  %606 = vmatpush1.msra.mxu0 %v586
  %607 = vmatprep.subr.mxu0 0.0
  %608 = vmatpush1.msra.mxu0 %v587
  %609 = vmatprep.subr.mxu0 0.0
  %610 = vmatpush1.msra.mxu0 %v588
  %611 = vmatprep.subr.mxu0 0.0
  %612 = vmatpush1.msra.mxu0 %v589
  %613 = vmatprep.subr.mxu0 0.0
  %614 = vmatpush1.msra.mxu0 %v590
  %615 = vmatprep.subr.mxu0 0.0
  %616 = vmatpush1.msra.mxu0 %v591
  %617 = vmatprep.subr.mxu0 0.0
  %618 = vmatpush1.msra.mxu0 %v592
  %619 = vmatprep.subr.mxu0 0.0
  %620 = vmatpush1.msra.mxu0 %v593
  %621 = vmatprep.subr.mxu0 0.0
  %622 = vmatpush1.msra.mxu0 %v594
  %623 = vmatprep.subr.mxu0 0.0
  %624 = vmatpush1.msra.mxu0 %v595
  %625 = vmatprep.subr.mxu0 0.0
  %626 = vmatpush1.msra.mxu0 %v596
  %627 = vmatprep.subr.mxu0 0.0
  %628 = vmatpush1.msra.mxu0 %v597
  %629 = vmatprep.subr.mxu0 0.0
  %630 = vmatpush1.msra.mxu0 %v598
  %631 = vmatprep.subr.mxu0 0.0
  %632 = vmatpush1.msra.mxu0 0.0
  %633 = vmatprep.subr.mxu0 0.0
  %634 = vmatpush1.msra.mxu0 0.0
  %635 = vmatprep.subr.mxu0 0.0
  %636 = vmatpush1.msra.mxu0 0.0
  %637 = vmatprep.subr.mxu0 0.0
  %638 = vmatpush1.msra.mxu0 0.0
  %639 = vmatprep.subr.mxu0 0.0
  %640 = vmatpush1.msra.mxu0 0.0
  %641 = vmatprep.subr.mxu0 0.0
  %642 = vmatpush1.msra.mxu0 0.0
  %643 = vmatprep.subr.mxu0 0.0
  %644 = vmatpush1.msra.mxu0 0.0
  %645 = vmatprep.subr.mxu0 0.0
  %646 = vmatpush1.msra.mxu0 0.0
  %647 = vmatprep.subr.mxu0 0.0
  %648 = vmatpush1.msra.mxu0 0.0
  %649 = vmatprep.subr.mxu0 0.0
  %650 = vmatpush1.msra.mxu0 0.0
  %651 = vmatprep.subr.mxu0 0.0
  %652 = vmatpush1.msra.mxu0 0.0
  %653 = vmatprep.subr.mxu0 0.0
  %654 = vmatpush1.msra.mxu0 0.0
  %655 = vmatprep.subr.mxu0 0.0
  %656 = vmatpush1.msra.mxu0 0.0
  %657 = vmatprep.subr.mxu0 0.0
  %658 = vmatpush1.msra.mxu0 0.0
  %659 = vmatprep.subr.mxu0 0.0
  %660 = vmatpush1.msra.mxu0 0.0
  %661 = vmatprep.subr.mxu0 0.0
  %662 = vmatpush1.msra.mxu0 0.0
  %663 = vmatprep.mubr.f32.mxu0 0.0
  %664 = vmatmul.mubr.f32.gmra.mrb[0].mxu0 %v578
  %v665 = vpop.f32.mrb[0].mxu0
  %v666 = vadd.f32 0.0, %v665
  %v667 = vpop.f32.mrb[0].mxu0
  %668 = vdwg.mxu0
  %v669 = vadd.f32 %v582, %v666
  %v670 = vtanh.pop %v669
  %s671 = scalar_lea.vmem %s6, 48
  %672 = vst [vmem:[%s671] sm:$0xff] %v670
  %s673 = scalar_lea.vmem %s0, 56
  %v674 = vld [vmem:[%s673] sm:$0xff]
  %v675 = vld [vmem:[%s1] sm:$0xff]
  %v676 = vld [vmem:[%s1 + $0x8] sm:$0xff]
  %v677 = vld [vmem:[%s1 + $0x10] sm:$0xff]
  %v678 = vld [vmem:[%s1 + $0x18] sm:$0xff]
  %v679 = vld [vmem:[%s1 + $0x20] sm:$0xff]
  %v680 = vld [vmem:[%s1 + $0x28] sm:$0xff]
  %v681 = vld [vmem:[%s1 + $0x30] sm:$0xff]
  %v682 = vld [vmem:[%s1 + $0x38] sm:$0xff]
  %v683 = vld [vmem:[%s1 + $0x40] sm:$0xff]
  %v684 = vld [vmem:[%s1 + $0x48] sm:$0xff]
  %v685 = vld [vmem:[%s1 + $0x50] sm:$0xff]
  %v686 = vld [vmem:[%s1 + $0x58] sm:$0xff]
  %v687 = vld [vmem:[%s1 + $0x60] sm:$0xff]
  %v688 = vld [vmem:[%s1 + $0x68] sm:$0xff]
  %v689 = vld [vmem:[%s1 + $0x70] sm:$0xff]
  %v690 = vld [vmem:[%s1 + $0x78] sm:$0xff]
  %691 = vmatprep.subr.mxu0 0.0
  %692 = vmatpush1.msra.mxu0 %v675
  %693 = vmatprep.subr.mxu0 0.0
  %694 = vmatpush1.msra.mxu0 %v676
  %695 = vmatprep.subr.mxu0 0.0
  %696 = vmatpush1.msra.mxu0 %v677
  %697 = vmatprep.subr.mxu0 0.0
  %698 = vmatpush1.msra.mxu0 %v678
  %699 = vmatprep.subr.mxu0 0.0
  %700 = vmatpush1.msra.mxu0 %v679
  %701 = vmatprep.subr.mxu0 0.0
  %702 = vmatpush1.msra.mxu0 %v680
  %703 = vmatprep.subr.mxu0 0.0
  %704 = vmatpush1.msra.mxu0 %v681
  %705 = vmatprep.subr.mxu0 0.0
  %706 = vmatpush1.msra.mxu0 %v682
  %707 = vmatprep.subr.mxu0 0.0
  %708 = vmatpush1.msra.mxu0 %v683
  %709 = vmatprep.subr.mxu0 0.0
  %710 = vmatpush1.msra.mxu0 %v684
  %711 = vmatprep.subr.mxu0 0.0
  %712 = vmatpush1.msra.mxu0 %v685
  %713 = vmatprep.subr.mxu0 0.0
  %714 = vmatpush1.msra.mxu0 %v686
  %715 = vmatprep.subr.mxu0 0.0
  %716 = vmatpush1.msra.mxu0 %v687
  %717 = vmatprep.subr.mxu0 0.0
  %718 = vmatpush1.msra.mxu0 %v688
  %719 = vmatprep.subr.mxu0 0.0
  %720 = vmatpush1.msra.mxu0 %v689
  %721 = vmatprep.subr.mxu0 0.0
  %722 = vmatpush1.msra.mxu0 %v690
  %723 = vmatprep.subr.mxu0 0.0
  %724 = vmatpush1.msra.mxu0 0.0
  %725 = vmatprep.subr.mxu0 0.0
  %726 = vmatpush1.msra.mxu0 0.0
  %727 = vmatprep.subr.mxu0 0.0
  %728 = vmatpush1.msra.mxu0 0.0
  %729 = vmatprep.subr.mxu0 0.0
  %730 = vmatpush1.msra.mxu0 0.0
  %731 = vmatprep.subr.mxu0 0.0
  %732 = vmatpush1.msra.mxu0 0.0
  %733 = vmatprep.subr.mxu0 0.0
  %734 = vmatpush1.msra.mxu0 0.0
  %735 = vmatprep.subr.mxu0 0.0
  %736 = vmatpush1.msra.mxu0 0.0
  %737 = vmatprep.subr.mxu0 0.0
  %738 = vmatpush1.msra.mxu0 0.0
  %739 = vmatprep.subr.mxu0 0.0
  %740 = vmatpush1.msra.mxu0 0.0
  %741 = vmatprep.subr.mxu0 0.0
  %742 = vmatpush1.msra.mxu0 0.0
  %743 = vmatprep.subr.mxu0 0.0
  %744 = vmatpush1.msra.mxu0 0.0
  %745 = vmatprep.subr.mxu0 0.0
  %746 = vmatpush1.msra.mxu0 0.0
  %747 = vmatprep.subr.mxu0 0.0
  %748 = vmatpush1.msra.mxu0 0.0
  %749 = vmatprep.subr.mxu0 0.0
  %750 = vmatpush1.msra.mxu0 0.0
  %751 = vmatprep.subr.mxu0 0.0
  %752 = vmatpush1.msra.mxu0 0.0
  %753 = vmatprep.subr.mxu0 0.0
  %754 = vmatpush1.msra.mxu0 0.0
  %755 = vmatprep.mubr.f32.mxu0 0.0
  %756 = vmatmul.mubr.f32.gmra.mrb[0].mxu0 %v670
  %v757 = vpop.f32.mrb[0].mxu0
  %v758 = vadd.f32 0.0, %v757
  %v759 = vpop.f32.mrb[0].mxu0
  %760 = vdwg.mxu0
  %v761 = vadd.f32 %v674, %v758
  %v762 = vtanh.pop %v761
  %s763 = scalar_lea.vmem %s6, 56
  %764 = vst [vmem:[%s763] sm:$0xff] %v762
  %765 = vst [vmem:[#allocation2] sm:$0xff] %v762
  %v766 = vld [vmem:[%s6] sm:$0xff]
  %v767 = vld [vmem:[%s6 + $0x8] sm:$0xff]
  %v768 = vld [vmem:[%s6 + $0x10] sm:$0xff]
  %v769 = vld [vmem:[%s6 + $0x18] sm:$0xff]
  %v770 = vld [vmem:[%s6 + $0x20] sm:$0xff]
  %v771 = vld [vmem:[%s6 + $0x28] sm:$0xff]
  %v772 = vld [vmem:[%s6 + $0x30] sm:$0xff]
  %v773 = vld [vmem:[%s6 + $0x38] sm:$0xff]
  %v774 = vld [vmem:[%s2] sm:$0xff]
  %v775 = vld [vmem:[%s2 + $0x8] sm:$0xff]
  %v776 = vld [vmem:[%s2 + $0x10] sm:$0xff]
  %v777 = vld [vmem:[%s2 + $0x18] sm:$0xff]
  %v778 = vld [vmem:[%s2 + $0x20] sm:$0xff]
  %v779 = vld [vmem:[%s2 + $0x28] sm:$0xff]
  %v780 = vld [vmem:[%s2 + $0x30] sm:$0xff]
  %v781 = vld [vmem:[%s2 + $0x38] sm:$0xff]
  %v782 = vld [vmem:[%s2 + $0x40] sm:$0xff]
  %v783 = vld [vmem:[%s2 + $0x48] sm:$0xff]
  %v784 = vld [vmem:[%s2 + $0x50] sm:$0xff]
  %v785 = vld [vmem:[%s2 + $0x58] sm:$0xff]
  %v786 = vld [vmem:[%s2 + $0x60] sm:$0xff]
  %v787 = vld [vmem:[%s2 + $0x68] sm:$0xff]
  %v788 = vld [vmem:[%s2 + $0x70] sm:$0xff]
  %v789 = vld [vmem:[%s2 + $0x78] sm:$0xff]
  %v790 = vld [vmem:[%s3] sm:$0x1]
  %v792 = vlaneseq
  %v793 = vshrl.u32 %v792, 7
  %v794 = vsub.s32 0, %v793
  %v795 = vrot.slane %v790, %v794
  %797 = vmatprep.subr.mxu0 0.0
  %798 = vmatpush1.msra.mxu0 %v774
  %799 = vmatprep.subr.mxu0 0.0
  %800 = vmatpush1.msra.mxu0 %v775
  %801 = vmatprep.subr.mxu0 0.0
  %802 = vmatpush1.msra.mxu0 %v776
  %803 = vmatprep.subr.mxu0 0.0
  %804 = vmatpush1.msra.mxu0 %v777
  %805 = vmatprep.subr.mxu0 0.0
  %806 = vmatpush1.msra.mxu0 %v778
  %807 = vmatprep.subr.mxu0 0.0
  %808 = vmatpush1.msra.mxu0 %v779
  %809 = vmatprep.subr.mxu0 0.0
  %810 = vmatpush1.msra.mxu0 %v780
  %811 = vmatprep.subr.mxu0 0.0
  %812 = vmatpush1.msra.mxu0 %v781
  %813 = vmatprep.subr.mxu0 0.0
  %814 = vmatpush1.msra.mxu0 %v782
  %815 = vmatprep.subr.mxu0 0.0
  %816 = vmatpush1.msra.mxu0 %v783
  %817 = vmatprep.subr.mxu0 0.0
  %818 = vmatpush1.msra.mxu0 %v784
  %819 = vmatprep.subr.mxu0 0.0
  %820 = vmatpush1.msra.mxu0 %v785
  %821 = vmatprep.subr.mxu0 0.0
  %822 = vmatpush1.msra.mxu0 %v786
  %823 = vmatprep.subr.mxu0 0.0
  %824 = vmatpush1.msra.mxu0 %v787
  %825 = vmatprep.subr.mxu0 0.0
  %826 = vmatpush1.msra.mxu0 %v788
  %827 = vmatprep.subr.mxu0 0.0
  %828 = vmatpush1.msra.mxu0 %v789
  %829 = vmatprep.subr.mxu0 0.0
  %830 = vmatpush1.msra.mxu0 0.0
  %831 = vmatprep.subr.mxu0 0.0
  %832 = vmatpush1.msra.mxu0 0.0
  %833 = vmatprep.subr.mxu0 0.0
  %834 = vmatpush1.msra.mxu0 0.0
  %835 = vmatprep.subr.mxu0 0.0
  %836 = vmatpush1.msra.mxu0 0.0
  %837 = vmatprep.subr.mxu0 0.0
  %838 = vmatpush1.msra.mxu0 0.0
  %839 = vmatprep.subr.mxu0 0.0
  %840 = vmatpush1.msra.mxu0 0.0
  %841 = vmatprep.subr.mxu0 0.0
  %842 = vmatpush1.msra.mxu0 0.0
  %843 = vmatprep.subr.mxu0 0.0
  %844 = vmatpush1.msra.mxu0 0.0
  %845 = vmatprep.subr.mxu0 0.0
  %846 = vmatpush1.msra.mxu0 0.0
  %847 = vmatprep.subr.mxu0 0.0
  %848 = vmatpush1.msra.mxu0 0.0
  %849 = vmatprep.subr.mxu0 0.0
  %850 = vmatpush1.msra.mxu0 0.0
  %851 = vmatprep.subr.mxu0 0.0
  %852 = vmatpush1.msra.mxu0 0.0
  %853 = vmatprep.subr.mxu0 0.0
  %854 = vmatpush1.msra.mxu0 0.0
  %855 = vmatprep.subr.mxu0 0.0
  %856 = vmatpush1.msra.mxu0 0.0
  %857 = vmatprep.subr.mxu0 0.0
  %858 = vmatpush1.msra.mxu0 0.0
  %859 = vmatprep.subr.mxu0 0.0
  %860 = vmatpush1.msra.mxu0 0.0
  %861 = vmatprep.mubr.f32.mxu0 0.0
  %862 = vmatmul.mubr.f32.gmra.mrb[0].mxu0 %v766
  %v863 = vpop.f32.mrb[0].mxu0
  %v864 = vadd.f32 %v795, %v863
  %v865 = vpop.f32.mrb[0].mxu0
  %866 = vmatprep.mubr.f32.mxu0 0.0
  %867 = vmatmul.mubr.f32.gmra.mrb[0].mxu0 %v767
  %v868 = vpop.f32.mrb[0].mxu0
  %v869 = vadd.f32 %v795, %v868
  %v870 = vpop.f32.mrb[0].mxu0
  %871 = vmatprep.mubr.f32.mxu0 0.0
  %872 = vmatmul.mubr.f32.gmra.mrb[0].mxu0 %v768
  %v873 = vpop.f32.mrb[0].mxu0
  %v874 = vadd.f32 %v795, %v873
  %v875 = vpop.f32.mrb[0].mxu0
  %876 = vmatprep.mubr.f32.mxu0 0.0
  %877 = vmatmul.mubr.f32.gmra.mrb[0].mxu0 %v769
  %v878 = vpop.f32.mrb[0].mxu0
  %v879 = vadd.f32 %v795, %v878
  %v880 = vpop.f32.mrb[0].mxu0
  %881 = vmatprep.mubr.f32.mxu0 0.0
  %882 = vmatmul.mubr.f32.gmra.mrb[0].mxu0 %v770
  %v883 = vpop.f32.mrb[0].mxu0
  %v884 = vadd.f32 %v795, %v883
  %v885 = vpop.f32.mrb[0].mxu0
  %886 = vmatprep.mubr.f32.mxu0 0.0
  %887 = vmatmul.mubr.f32.gmra.mrb[0].mxu0 %v771
  %v888 = vpop.f32.mrb[0].mxu0
  %v889 = vadd.f32 %v795, %v888
  %v890 = vpop.f32.mrb[0].mxu0
  %891 = vmatprep.mubr.f32.mxu0 0.0
  %892 = vmatmul.mubr.f32.gmra.mrb[0].mxu0 %v772
  %v893 = vpop.f32.mrb[0].mxu0
  %v894 = vadd.f32 %v795, %v893
  %v895 = vpop.f32.mrb[0].mxu0
  %896 = vmatprep.mubr.f32.mxu0 0.0
  %897 = vmatmul.mubr.f32.gmra.mrb[0].mxu0 %v773
  %v898 = vpop.f32.mrb[0].mxu0
  %v899 = vadd.f32 %v795, %v898
  %v900 = vpop.f32.mrb[0].mxu0
  %901 = vdwg.mxu0
  %v902 = vxor.u32 %v864, 2147483648
  %v903 = vxor.u32 %v869, 2147483648
  %v904 = vxor.u32 %v874, 2147483648
  %v905 = vxor.u32 %v879, 2147483648
  %v906 = vxor.u32 %v884, 2147483648
  %v907 = vxor.u32 %v889, 2147483648
  %v908 = vxor.u32 %v894, 2147483648
  %v909 = vxor.u32 %v899, 2147483648
  %v910 = vmul.f32 %v902, 1.442695
  %v911 = vpow.pop %v910
  %v912 = vmul.f32 %v903, 1.442695
  %v913 = vpow.pop %v912
  %v914 = vmul.f32 %v904, 1.442695
  %v915 = vpow.pop %v914
  %v916 = vmul.f32 %v905, 1.442695
  %v917 = vpow.pop %v916
  %v918 = vmul.f32 %v906, 1.442695
  %v919 = vpow.pop %v918
  %v920 = vmul.f32 %v907, 1.442695
  %v921 = vpow.pop %v920
  %v922 = vmul.f32 %v908, 1.442695
  %v923 = vpow.pop %v922
  %v924 = vmul.f32 %v909, 1.442695
  %v925 = vpow.pop %v924
  %v926 = vadd.f32 %v911, 1.0
  %v927 = vadd.f32 %v913, 1.0
  %v928 = vadd.f32 %v915, 1.0
  %v929 = vadd.f32 %v917, 1.0
  %v930 = vadd.f32 %v919, 1.0
  %v931 = vadd.f32 %v921, 1.0
  %v932 = vadd.f32 %v923, 1.0
  %v933 = vadd.f32 %v925, 1.0
  %v934 = vrcp.pop %v926
  %v935 = vmul.f32 1.0, %v934
  %v936 = vrcp.pop %v927
  %v937 = vmul.f32 1.0, %v936
  %v938 = vrcp.pop %v928
  %v939 = vmul.f32 1.0, %v938
  %v940 = vrcp.pop %v929
  %v941 = vmul.f32 1.0, %v940
  %v942 = vrcp.pop %v930
  %v943 = vmul.f32 1.0, %v942
  %v944 = vrcp.pop %v931
  %v945 = vmul.f32 1.0, %v944
  %v946 = vrcp.pop %v932
  %v947 = vmul.f32 1.0, %v946
  %v948 = vrcp.pop %v933
  %v949 = vmul.f32 1.0, %v948
  %v950 = vld [vmem:[%s4] sm:$0xff]
  %v951 = vld [vmem:[%s4 + $0x8] sm:$0xff]
  %v952 = vld [vmem:[%s4 + $0x10] sm:$0xff]
  %v953 = vld [vmem:[%s4 + $0x18] sm:$0xff]
  %v954 = vld [vmem:[%s4 + $0x20] sm:$0xff]
  %v955 = vld [vmem:[%s4 + $0x28] sm:$0xff]
  %v956 = vld [vmem:[%s4 + $0x30] sm:$0xff]
  %v957 = vld [vmem:[%s4 + $0x38] sm:$0xff]
  %v958 = vld [vmem:[%s4 + $0x40] sm:$0xff]
  %v959 = vld [vmem:[%s4 + $0x48] sm:$0xff]
  %v960 = vld [vmem:[%s4 + $0x50] sm:$0xff]
  %v961 = vld [vmem:[%s4 + $0x58] sm:$0xff]
  %v962 = vld [vmem:[%s4 + $0x60] sm:$0xff]
  %v963 = vld [vmem:[%s4 + $0x68] sm:$0xff]
  %v964 = vld [vmem:[%s4 + $0x70] sm:$0xff]
  %v965 = vld [vmem:[%s4 + $0x78] sm:$0xff]
  %v966 = vld [vmem:[%s5] sm:$0x1]
  %v968 = vlaneseq
  %v969 = vshrl.u32 %v968, 7
  %v970 = vsub.s32 0, %v969
  %v971 = vrot.slane %v966, %v970
  %973 = vmatprep.subr.mxu0 0.0
  %974 = vmatpush1.msra.mxu0 %v950
  %975 = vmatprep.subr.mxu0 0.0
  %976 = vmatpush1.msra.mxu0 %v951
  %977 = vmatprep.subr.mxu0 0.0
  %978 = vmatpush1.msra.mxu0 %v952
  %979 = vmatprep.subr.mxu0 0.0
  %980 = vmatpush1.msra.mxu0 %v953
  %981 = vmatprep.subr.mxu0 0.0
  %982 = vmatpush1.msra.mxu0 %v954
  %983 = vmatprep.subr.mxu0 0.0
  %984 = vmatpush1.msra.mxu0 %v955
  %985 = vmatprep.subr.mxu0 0.0
  %986 = vmatpush1.msra.mxu0 %v956
  %987 = vmatprep.subr.mxu0 0.0
  %988 = vmatpush1.msra.mxu0 %v957
  %989 = vmatprep.subr.mxu0 0.0
  %990 = vmatpush1.msra.mxu0 %v958
  %991 = vmatprep.subr.mxu0 0.0
  %992 = vmatpush1.msra.mxu0 %v959
  %993 = vmatprep.subr.mxu0 0.0
  %994 = vmatpush1.msra.mxu0 %v960
  %995 = vmatprep.subr.mxu0 0.0
  %996 = vmatpush1.msra.mxu0 %v961
  %997 = vmatprep.subr.mxu0 0.0
  %998 = vmatpush1.msra.mxu0 %v962
  %999 = vmatprep.subr.mxu0 0.0
  %1000 = vmatpush1.msra.mxu0 %v963
  %1001 = vmatprep.subr.mxu0 0.0
  %1002 = vmatpush1.msra.mxu0 %v964
  %1003 = vmatprep.subr.mxu0 0.0
  %1004 = vmatpush1.msra.mxu0 %v965
  %1005 = vmatprep.subr.mxu0 0.0
  %1006 = vmatpush1.msra.mxu0 0.0
  %1007 = vmatprep.subr.mxu0 0.0
  %1008 = vmatpush1.msra.mxu0 0.0
  %1009 = vmatprep.subr.mxu0 0.0
  %1010 = vmatpush1.msra.mxu0 0.0
  %1011 = vmatprep.subr.mxu0 0.0
  %1012 = vmatpush1.msra.mxu0 0.0
  %1013 = vmatprep.subr.mxu0 0.0
  %1014 = vmatpush1.msra.mxu0 0.0
  %1015 = vmatprep.subr.mxu0 0.0
  %1016 = vmatpush1.msra.mxu0 0.0
  %1017 = vmatprep.subr.mxu0 0.0
  %1018 = vmatpush1.msra.mxu0 0.0
  %1019 = vmatprep.subr.mxu0 0.0
  %1020 = vmatpush1.msra.mxu0 0.0
  %1021 = vmatprep.subr.mxu0 0.0
  %1022 = vmatpush1.msra.mxu0 0.0
  %1023 = vmatprep.subr.mxu0 0.0
  %1024 = vmatpush1.msra.mxu0 0.0
  %1025 = vmatprep.subr.mxu0 0.0
  %1026 = vmatpush1.msra.mxu0 0.0
  %1027 = vmatprep.subr.mxu0 0.0
  %1028 = vmatpush1.msra.mxu0 0.0
  %1029 = vmatprep.subr.mxu0 0.0
  %1030 = vmatpush1.msra.mxu0 0.0
  %1031 = vmatprep.subr.mxu0 0.0
  %1032 = vmatpush1.msra.mxu0 0.0
  %1033 = vmatprep.subr.mxu0 0.0
  %1034 = vmatpush1.msra.mxu0 0.0
  %1035 = vmatprep.subr.mxu0 0.0
  %1036 = vmatpush1.msra.mxu0 0.0
  %1037 = vmatprep.mubr.f32.mxu0 0.0
  %1038 = vmatmul.mubr.f32.gmra.mrb[0].mxu0 %v935
  %v1039 = vpop.f32.mrb[0].mxu0
  %v1040 = vadd.f32 %v971, %v1039
  %v1041 = vpop.f32.mrb[0].mxu0
  %1042 = vmatprep.mubr.f32.mxu0 0.0
  %1043 = vmatmul.mubr.f32.gmra.mrb[0].mxu0 %v937
  %v1044 = vpop.f32.mrb[0].mxu0
  %v1045 = vadd.f32 %v971, %v1044
  %v1046 = vpop.f32.mrb[0].mxu0
  %1047 = vmatprep.mubr.f32.mxu0 0.0
  %1048 = vmatmul.mubr.f32.gmra.mrb[0].mxu0 %v939
  %v1049 = vpop.f32.mrb[0].mxu0
  %v1050 = vadd.f32 %v971, %v1049
  %v1051 = vpop.f32.mrb[0].mxu0
  %1052 = vmatprep.mubr.f32.mxu0 0.0
  %1053 = vmatmul.mubr.f32.gmra.mrb[0].mxu0 %v941
  %v1054 = vpop.f32.mrb[0].mxu0
  %v1055 = vadd.f32 %v971, %v1054
  %v1056 = vpop.f32.mrb[0].mxu0
  %1057 = vmatprep.mubr.f32.mxu0 0.0
  %1058 = vmatmul.mubr.f32.gmra.mrb[0].mxu0 %v943
  %v1059 = vpop.f32.mrb[0].mxu0
  %v1060 = vadd.f32 %v971, %v1059
  %v1061 = vpop.f32.mrb[0].mxu0
  %1062 = vmatprep.mubr.f32.mxu0 0.0
  %1063 = vmatmul.mubr.f32.gmra.mrb[0].mxu0 %v945
  %v1064 = vpop.f32.mrb[0].mxu0
  %v1065 = vadd.f32 %v971, %v1064
  %v1066 = vpop.f32.mrb[0].mxu0
  %1067 = vmatprep.mubr.f32.mxu0 0.0
  %1068 = vmatmul.mubr.f32.gmra.mrb[0].mxu0 %v947
  %v1069 = vpop.f32.mrb[0].mxu0
  %v1070 = vadd.f32 %v971, %v1069
  %v1071 = vpop.f32.mrb[0].mxu0
  %1072 = vmatprep.mubr.f32.mxu0 0.0
  %1073 = vmatmul.mubr.f32.gmra.mrb[0].mxu0 %v949
  %v1074 = vpop.f32.mrb[0].mxu0
  %v1075 = vadd.f32 %v971, %v1074
  %v1076 = vpop.f32.mrb[0].mxu0
  %1077 = vdwg.mxu0
  %1078 = vst [vmem:[%s7] sm:$0xff] %v1040
  %1079 = vst [vmem:[%s7 + $0x8] sm:$0xff] %v1045
  %1080 = vst [vmem:[%s7 + $0x10] sm:$0xff] %v1050
  %1081 = vst [vmem:[%s7 + $0x18] sm:$0xff] %v1055
  %1082 = vst [vmem:[%s7 + $0x20] sm:$0xff] %v1060
  %1083 = vst [vmem:[%s7 + $0x28] sm:$0xff] %v1065
  %1084 = vst [vmem:[%s7 + $0x30] sm:$0xff] %v1070
  %1085 = vst [vmem:[%s7 + $0x38] sm:$0xff] %v1075
  // Predicated region
  $region30: #{autoencoder_rnn_forward.3} parent=0 // pred_check
    _
  $region31: #{autoencoder_rnn_forward.3} parent=0 // pred_check_branch
    %1087 = sbr.rel (0) target = $region33
  $region32: #{autoencoder_rnn_forward.3} parent=0 // pred_region
    _
  $region33: #{autoencoder_rnn_forward.3} parent=0 // pred_fallthru
    _
  // Predicated region
  $region34: #{autoencoder_rnn_forward.3} parent=0 // pred_check
    _
  $region35: #{autoencoder_rnn_forward.3} parent=0 // pred_check_branch
    %1089 = sbr.rel (0) target = $region37
  $region36: #{autoencoder_rnn_forward.3} parent=0 // pred_region
    _
  $region37: #{autoencoder_rnn_forward.3} parent=0 // pred_fallthru
    _
  // Predicated region
  $region38: #{autoencoder_rnn_forward.3} parent=0 // pred_check
    _
  $region39: #{autoencoder_rnn_forward.3} parent=0 // pred_check_branch
    %1091 = sbr.rel (0) target = $region41
  $region40: #{autoencoder_rnn_forward.3} parent=0 // pred_region
    _
  $region41: #{autoencoder_rnn_forward.3} parent=0 // pred_fallthru
    _
  // Predicated region
  $region42: #{autoencoder_rnn_forward.3} parent=0 // pred_check
    _
  $region43: #{autoencoder_rnn_forward.3} parent=0 // pred_check_branch
    %1093 = sbr.rel (0) target = $region45
  $region44: #{autoencoder_rnn_forward.3} parent=0 // pred_region
    _
  $region45: #{autoencoder_rnn_forward.3} parent=0 // pred_fallthru
    _

</llo_original>
